<compile_context>
chip_gen: v7x
topology: tpu7x:2x2x1
jax: 0.10.0
libtpu: 0.0.40
codegen_flags: <defaults>
</compile_context>

<pallas_src>
import jax
import jax.numpy as jnp
from jax import lax
from jax.experimental import pallas as pl
from jax.experimental.pallas import tpu as pltpu

IMAGE_SIZE = 28 * 28   # 784
HIDDEN_SIZE = 256
LEAKY_SLOPE = 0.2


def _round_up(n, m):
    return ((n + m - 1) // m) * m


def _discriminator_kernel(x_ref, w1_ref, b1_ref, w2_ref, b2_ref, w3_ref, b3_ref,
                          o_ref):
    # x arrives as f32 straight from HBM; cast to bf16 here (VPU, hidden under
    # the x DMA) instead of a separate wrapper-side XLA pass over x.
    x = x_ref[...].astype(jnp.bfloat16)

    # Layer 1: bf16 MXU matmul with f32 accumulation, LeakyReLU as a single max.
    h1 = jnp.dot(x, w1_ref[...], preferred_element_type=jnp.float32) + b1_ref[...]
    h1 = jnp.maximum(h1, LEAKY_SLOPE * h1)

    # Layer 2.
    h2 = jnp.dot(h1.astype(jnp.bfloat16), w2_ref[...],
                 preferred_element_type=jnp.float32) + b2_ref[...]
    h2 = jnp.maximum(h2, LEAKY_SLOPE * h2)

    # Layer 3: (1,256) x (tile_b,256)^T on the MXU -> lane-dense (1, tile_b)
    # row (keeps the store path dense; MXU has slack on the mem-bound chips).
    h3 = lax.dot_general(w3_ref[...], h2, (((1,), (1,)), ((), ())),
                         preferred_element_type=jnp.float32) + b3_ref[...]

    o_ref[...] = jax.nn.sigmoid(h3)


def discriminator_forward(x, params, *, tile_b=1024):
    """x: [B, IMAGE_SIZE] float -> [B, 1] float32."""
    w1, b1, w2, b2, w3, b3 = params
    B = x.shape[0]

    # x stays f32 — no wrapper cast/pad pass over the dominant operand.
    x_f = x.astype(jnp.float32)          # no-op when already f32
    w1_bf = w1.astype(jnp.bfloat16)      # small one-time casts (~0.6 MiB total)
    w2_bf = w2.astype(jnp.bfloat16)
    b1_f = b1.astype(jnp.float32).reshape(1, HIDDEN_SIZE)
    b2_f = b2.astype(jnp.float32).reshape(1, HIDDEN_SIZE)
    w3_row = w3.astype(jnp.float32).reshape(1, HIDDEN_SIZE)
    b3_f = b3.astype(jnp.float32).reshape(1, 1)

    # Batch tile: multiple of 128 (lane-dense output block, clean bf16
    # packing). Cap so the grid has >= 2 tiles when B > 128 (v7x: 2 TCs).
    if B <= 128:
        tile_b = _round_up(B, 8)                              # single tile
    else:
        tile_b = min(tile_b, _round_up(pl.cdiv(B, 2), 128))
        tile_b = max(128, _round_up(tile_b, 128))
    n_tiles = pl.cdiv(B, tile_b)          # ragged last x block; no pad copy

    const = lambda i: (0, 0)  # weights/biases stay VMEM-resident across steps

    flops = 2 * B * (IMAGE_SIZE * HIDDEN_SIZE
                     + HIDDEN_SIZE * HIDDEN_SIZE
                     + HIDDEN_SIZE)
    bytes_accessed = (x_f.size * 4 + w1_bf.size * 2 + w2_bf.size * 2
                      + (b1_f.size + b2_f.size + w3_row.size + b3_f.size) * 4
                      + n_tiles * tile_b * 4)

    out = pl.pallas_call(
        _discriminator_kernel,
        out_shape=jax.ShapeDtypeStruct((1, n_tiles * tile_b), jnp.float32),
        grid=(n_tiles,),
        in_specs=[
            pl.BlockSpec((tile_b, IMAGE_SIZE), lambda i: (i, 0)),   # x (f32)
            pl.BlockSpec((IMAGE_SIZE, HIDDEN_SIZE), const),         # w1 (bf16)
            pl.BlockSpec((1, HIDDEN_SIZE), const),                  # b1 (f32)
            pl.BlockSpec((HIDDEN_SIZE, HIDDEN_SIZE), const),        # w2 (bf16)
            pl.BlockSpec((1, HIDDEN_SIZE), const),                  # b2 (f32)
            pl.BlockSpec((1, HIDDEN_SIZE), const),                  # w3 row
            pl.BlockSpec((1, 1), const),                            # b3
        ],
        out_specs=pl.BlockSpec((1, tile_b), lambda i: (0, i)),      # lane-dense
        compiler_params=pltpu.CompilerParams(
            dimension_semantics=("parallel",),
            vmem_limit_bytes=48 * 1024 * 1024),
        cost_estimate=pl.CostEstimate(
            flops=flops,
            transcendentals=B,
            bytes_accessed=bytes_accessed),
    )(x_f, w1_bf, b1_f, w2_bf, b2_f, w3_row, b3_f)

    # (1, n_tiles*tile_b) -> [B, 1]; contiguous reshape + slice, negligible.
    return out.reshape(-1)[:B].reshape(B, 1)


def init_params(key):
    """Deterministic init matching nn.Linear shapes (stored transposed: [in, out])."""
    ks = jax.random.split(key, 6)

    def linear(kw, kb, fan_in, fan_out):
        bound = 1.0 / jnp.sqrt(fan_in)
        # PyTorch Linear weight is [out, in]; we store its transpose [in, out].
        w = jax.random.uniform(kw, (fan_in, fan_out), jnp.float32, -bound, bound)
        b = jax.random.uniform(kb, (1, fan_out), jnp.float32, -bound, bound)
        return w, b

    w1, b1 = linear(ks[0], ks[1], IMAGE_SIZE, HIDDEN_SIZE)
    w2, b2 = linear(ks[2], ks[3], HIDDEN_SIZE, HIDDEN_SIZE)
    w3, b3 = linear(ks[4], ks[5], HIDDEN_SIZE, 1)
    return (w1, b1, w2, b2, w3, b3)


def _reference_forward(x, params):
    """Pure-JAX f32 reference of the PyTorch module."""
    w1, b1, w2, b2, w3, b3 = params
    h = x @ w1 + b1
    h = jnp.where(h >= 0, h, LEAKY_SLOPE * h)
    h = h @ w2 + b2
    h = jnp.where(h >= 0, h, LEAKY_SLOPE * h)
    h = h @ w3 + b3
    return jax.nn.sigmoid(h)


if __name__ == "__main__":
    key = jax.random.PRNGKey(0)
    k_x, k_p = jax.random.split(key)

    # batch not a multiple of 128 -> exercises the 2-tile grid + ragged last
    # x block + output slicing.
    batch = 200
    x = jax.random.normal(k_x, (batch, IMAGE_SIZE), dtype=jnp.float32)
    params = init_params(k_p)

    out = discriminator_forward(x, params)       # tile_b -> 128, grid = (2,)
    out = jax.block_until_ready(out)

    ref = _reference_forward(x, params)
    assert out.shape == (batch, 1)
    # bf16 x/w1/w2 with f32 accumulation: loosen tolerance vs f32 ref.
    assert jnp.allclose(out, ref, atol=2e-2, rtol=0.0), float(
        jnp.max(jnp.abs(out - ref)))

    print("KERNEL_OK")
</pallas_src>

<mosaic_0001>
module attributes {stable_mosaic.version = 11 : i64} {
  func.func @_discriminator_kernel(%arg0: i32, %arg1: memref<128x784xf32, #tpu.memory_space<vmem>>, %arg2: memref<784x256xbf16, #tpu.memory_space<vmem>>, %arg3: memref<1x256xf32, #tpu.memory_space<vmem>>, %arg4: memref<256x256xbf16, #tpu.memory_space<vmem>>, %arg5: memref<1x256xf32, #tpu.memory_space<vmem>>, %arg6: memref<1x256xf32, #tpu.memory_space<vmem>>, %arg7: memref<1x1xf32, #tpu.memory_space<vmem>>, %arg8: memref<1x128xf32, #tpu.memory_space<vmem>>) attributes {dimension_semantics = [#tpu.dimension_semantics<parallel>], iteration_bounds = array<i64: 2>, scalar_prefetch = 0 : i64, scratch_operands = 0 : i64, tpu.core_type = #tpu.core_type<tc>, window_params = [{transform_indices = @transform_0, window_bounds = array<i64: 128, 784>}, {pipeline_mode = #tpu.pipeline_mode<synchronous>, transform_indices = @transform_1, window_bounds = array<i64: 784, 256>}, {pipeline_mode = #tpu.pipeline_mode<synchronous>, transform_indices = @transform_2, window_bounds = array<i64: 1, 256>}, {pipeline_mode = #tpu.pipeline_mode<synchronous>, transform_indices = @transform_3, window_bounds = array<i64: 256, 256>}, {pipeline_mode = #tpu.pipeline_mode<synchronous>, transform_indices = @transform_4, window_bounds = array<i64: 1, 256>}, {pipeline_mode = #tpu.pipeline_mode<synchronous>, transform_indices = @transform_5, window_bounds = array<i64: 1, 256>}, {pipeline_mode = #tpu.pipeline_mode<synchronous>, transform_indices = @transform_6, window_bounds = array<i64: 1, 1>}, {transform_indices = @transform_7, window_bounds = array<i64: 1, 128>}]} {
    %c0 = arith.constant 0 : index
    %c0_0 = arith.constant 0 : index
    %0 = vector.load %arg1[%c0, %c0_0] : memref<128x784xf32, #tpu.memory_space<vmem>>, vector<128x784xf32>
    %1 = arith.truncf %0 : vector<128x784xf32> to vector<128x784xbf16>
    %c0_1 = arith.constant 0 : index
    %c0_2 = arith.constant 0 : index
    %2 = vector.load %arg2[%c0_1, %c0_2] : memref<784x256xbf16, #tpu.memory_space<vmem>>, vector<784x256xbf16>
    %cst = arith.constant dense<0.000000e+00> : vector<128x256xf32>
    %3 = tpu.matmul %1, %2, %cst {dimension_numbers = #tpu.dot_dimension_numbers<[1], [0], [0], [1], [0, 0, 1, 1], [], []>} : vector<128x784xbf16>, vector<784x256xbf16>, vector<128x256xf32> -> vector<128x256xf32>
    %c0_3 = arith.constant 0 : index
    %c0_4 = arith.constant 0 : index
    %4 = vector.load %arg3[%c0_3, %c0_4] : memref<1x256xf32, #tpu.memory_space<vmem>>, vector<1x256xf32>
    %5 = vector.broadcast %4 : vector<1x256xf32> to vector<128x256xf32>
    %6 = arith.addf %3, %5 : vector<128x256xf32>
    %cst_5 = arith.constant 2.000000e-01 : f32
    %7 = vector.broadcast %cst_5 : f32 to vector<128x256xf32>
    %8 = arith.mulf %7, %6 : vector<128x256xf32>
    %9 = arith.maximumf %6, %8 : vector<128x256xf32>
    %10 = arith.truncf %9 : vector<128x256xf32> to vector<128x256xbf16>
    %c0_6 = arith.constant 0 : index
    %c0_7 = arith.constant 0 : index
    %11 = vector.load %arg4[%c0_6, %c0_7] : memref<256x256xbf16, #tpu.memory_space<vmem>>, vector<256x256xbf16>
    %cst_8 = arith.constant dense<0.000000e+00> : vector<128x256xf32>
    %12 = tpu.matmul %10, %11, %cst_8 {dimension_numbers = #tpu.dot_dimension_numbers<[1], [0], [0], [1], [0, 0, 1, 1], [], []>} : vector<128x256xbf16>, vector<256x256xbf16>, vector<128x256xf32> -> vector<128x256xf32>
    %c0_9 = arith.constant 0 : index
    %c0_10 = arith.constant 0 : index
    %13 = vector.load %arg5[%c0_9, %c0_10] : memref<1x256xf32, #tpu.memory_space<vmem>>, vector<1x256xf32>
    %14 = vector.broadcast %13 : vector<1x256xf32> to vector<128x256xf32>
    %15 = arith.addf %12, %14 : vector<128x256xf32>
    %cst_11 = arith.constant 2.000000e-01 : f32
    %16 = vector.broadcast %cst_11 : f32 to vector<128x256xf32>
    %17 = arith.mulf %16, %15 : vector<128x256xf32>
    %18 = arith.maximumf %15, %17 : vector<128x256xf32>
    %c0_12 = arith.constant 0 : index
    %c0_13 = arith.constant 0 : index
    %19 = vector.load %arg6[%c0_12, %c0_13] : memref<1x256xf32, #tpu.memory_space<vmem>>, vector<1x256xf32>
    %cst_14 = arith.constant dense<0.000000e+00> : vector<1x128xf32>
    %20 = tpu.matmul %19, %18, %cst_14 {dimension_numbers = #tpu.dot_dimension_numbers<[1], [1], [0], [0], [0, 0, 1, 0], [], []>} : vector<1x256xf32>, vector<128x256xf32>, vector<1x128xf32> -> vector<1x128xf32>
    %c0_15 = arith.constant 0 : index
    %c0_16 = arith.constant 0 : index
    %21 = vector.load %arg7[%c0_15, %c0_16] : memref<1x1xf32, #tpu.memory_space<vmem>>, vector<1x1xf32>
    %22 = vector.broadcast %21 : vector<1x1xf32> to vector<1x128xf32>
    %23 = arith.addf %20, %22 : vector<1x128xf32>
    %24 = arith.negf %23 : vector<1x128xf32>
    %25 = math.exp %24 : vector<1x128xf32>
    %cst_17 = arith.constant 1.000000e+00 : f32
    %26 = vector.broadcast %cst_17 : f32 to vector<1x128xf32>
    %27 = arith.addf %26, %25 : vector<1x128xf32>
    %28 = arith.divf %26, %27 : vector<1x128xf32>
    %c0_18 = arith.constant 0 : index
    %c0_19 = arith.constant 0 : index
    %29 = vector.load %arg8[%c0_18, %c0_19] : memref<1x128xf32, #tpu.memory_space<vmem>>, vector<1x128xf32>
    tpu.vector_store %arg8[%c0_18, %c0_19], %28 {strides = array<i32>} : memref<1x128xf32, #tpu.memory_space<vmem>>, vector<1x128xf32>,
    return
  }
  func.func @transform_0(%arg0: i32) -> (i32, i32) {
    %c0_i32 = arith.constant 0 : i32
    %c0_i32_0 = arith.constant 0 : i32
    return %arg0, %c0_i32 : i32, i32
  }
  func.func @transform_1(%arg0: i32) -> (i32, i32) {
    %c0_i32 = arith.constant 0 : i32
    %c0_i32_0 = arith.constant 0 : i32
    %c0_i32_1 = arith.constant 0 : i32
    return %c0_i32, %c0_i32_0 : i32, i32
  }
  func.func @transform_2(%arg0: i32) -> (i32, i32) {
    %c0_i32 = arith.constant 0 : i32
    %c0_i32_0 = arith.constant 0 : i32
    %c0_i32_1 = arith.constant 0 : i32
    return %c0_i32, %c0_i32_0 : i32, i32
  }
  func.func @transform_3(%arg0: i32) -> (i32, i32) {
    %c0_i32 = arith.constant 0 : i32
    %c0_i32_0 = arith.constant 0 : i32
    %c0_i32_1 = arith.constant 0 : i32
    return %c0_i32, %c0_i32_0 : i32, i32
  }
  func.func @transform_4(%arg0: i32) -> (i32, i32) {
    %c0_i32 = arith.constant 0 : i32
    %c0_i32_0 = arith.constant 0 : i32
    %c0_i32_1 = arith.constant 0 : i32
    return %c0_i32, %c0_i32_0 : i32, i32
  }
  func.func @transform_5(%arg0: i32) -> (i32, i32) {
    %c0_i32 = arith.constant 0 : i32
    %c0_i32_0 = arith.constant 0 : i32
    %c0_i32_1 = arith.constant 0 : i32
    return %c0_i32, %c0_i32_0 : i32, i32
  }
  func.func @transform_6(%arg0: i32) -> (i32, i32) {
    %c0_i32 = arith.constant 0 : i32
    %c0_i32_0 = arith.constant 0 : i32
    %c0_i32_1 = arith.constant 0 : i32
    return %c0_i32, %c0_i32_0 : i32, i32
  }
  func.func @transform_7(%arg0: i32) -> (i32, i32) {
    %c0_i32 = arith.constant 0 : i32
    %c0_i32_0 = arith.constant 0 : i32
    return %c0_i32, %arg0 : i32, i32
  }
}

</mosaic_0001>

<llo_original>
// kernel: tpu_custom_call.1
$region0: #{tpu_custom_call.1}
  #allocation0 [shape = 'u32[]', space=smem, size = 0x4, offset = 0x4, fixed_abs, tag = 'smem constant byte address 0x4 - core index']
  #allocation1 [shape = 'u32[144,128]{1,0:T(1,128)}', space=vmem, size = 0x12000, scoped, tag = 'internal scratch']
  #allocation2 [shape = 'f32[1,1]{1,0:T(1,128)S(1)}', space=vmem, size = 0x200, scoped, tag = 'scoped memory for tpu_custom_call.1']
  %s0 = inlined_call_operand.hbm [shape: f32[200,784], index: 0, kind: input, shape index: {}]
  %s1 = inlined_call_operand.hbm [shape: bf16[784,256], index: 1, kind: input, shape index: {}]
  %s2 = inlined_call_operand.vmem [shape: f32[1,256], index: 2, kind: input, shape index: {}]
  %s3 = inlined_call_operand.hbm [shape: bf16[256,256], index: 3, kind: input, shape index: {}]
  %s4 = inlined_call_operand.vmem [shape: f32[1,256], index: 4, kind: input, shape index: {}]
  %s5 = inlined_call_operand.vmem [shape: f32[1,256], index: 5, kind: input, shape index: {}]
  %s6 = inlined_call_operand.<no memory space> [shape: f32[1,1], index: 6, kind: input, shape index: {}]
  %s7 = inlined_call_operand.hbm [shape: f32[1,256], index: 7, kind: output, shape index: {}]
  %s8 = sld [smem:[#allocation0]]
  $region73: #{tpu_custom_call.1} parent=0
    _
  %s10 = ssub.s32 1, %s8
  %s11 = scalar_select 0, %s10, %s8
  %v12 = vstv %s6
  %13 = vst [vmem:[#allocation2] sm:$0x1] %v12
  $region1: #{tpu_custom_call.1} parent=0
    #allocation3 [shape = 'u8[917504]{0}', space=vmem, size = 0xe0000, scoped, tag = 'input window, operand 0']
    #allocation4 [shape = 's32[2]{0}', space=sflag, size = 0x8, scoped, tag = 'scoped memory for tpu_custom_call.1']
    #allocation5 [shape = 's32[2]{0}', space=sflag, size = 0x8, scoped, tag = 'scoped memory for tpu_custom_call.1']
    #allocation6 [shape = 'u8[401408]{0}', space=vmem, size = 0x62000, scoped, tag = 'input window, operand 1, single buffered']
    #allocation7 [shape = 's32[1]{0}', space=sflag, size = 0x4, scoped, tag = 'scoped memory for tpu_custom_call.1']
    #allocation8 [shape = 'u8[131072]{0}', space=vmem, size = 0x20000, scoped, tag = 'input window, operand 3, single buffered']
    #allocation9 [shape = 'u8[1024]{0}', space=vmem, size = 0x400, scoped, tag = 'output window, operand 0']
    %14 = vsyncpa [#allocation4], 0
    %s15 = scalar_lea.sflag [#allocation4], 1
    %16 = vsyncpa %s15, 0
    %17 = vsyncpa [#allocation7], 0
    %18 = vsyncpa [#allocation5], 0
    %s19 = scalar_lea.sflag [#allocation5], 1
    %20 = vsyncpa %s19, 0
    loop: start=0, step=1, limit=4
    $region2: #{tpu_custom_call.1} parent=1 // loop_pre_header
      _
    $region3: #{tpu_custom_call.1} parent=1 // loop_header
      %s22 = sphi 0, %s26
      %p23 = scmp.ge.s32.totalorder %s22, 4
      %s32 = sphi 0, %s34
      %s35 = sphi 0, %s32
      %s36 = sphi 0, %s35
      %s52 = sphi 0, %s36
      %s56 = sphi 0, %s56
      %s58 = sphi 0, %s56
      %s59 = sphi 0, %s58
      %s73 = sphi 0, %s59
      %s77 = sphi 0, %s77
      %s79 = sphi 0, %s77
      %s80 = sphi 0, %s79
      %s94 = sphi 0, %s80
      %s98 = sphi 0, %s98
      %s100 = sphi 0, %s98
      %s101 = sphi 0, %s100
      %s115 = sphi 0, %s101
      %s119 = sphi 0, %s119
      %s121 = sphi 0, %s119
      %s122 = sphi 0, %s121
      %s136 = sphi 0, %s122
      %s140 = sphi 0, %s140
      %s142 = sphi 0, %s140
      %s143 = sphi 0, %s142
      %s157 = sphi 0, %s143
      %s161 = sphi 0, %s161
      %s163 = sphi 0, %s161
      %s164 = sphi 0, %s163
      %s178 = sphi 0, %s164
      %s184 = sphi 0, %s186
      %s187 = sphi 0, %s184
      %s188 = sphi 0, %s187
      %s204 = sphi 0, %s188
    $region4: #{tpu_custom_call.1} parent=1 // loop_header_branch
      %25 = sbr.rel (%p23) target = $region8
    $region5: #{tpu_custom_call.1} parent=1 // loop_body
      %s27 = ssub.s32 %s22, 1
      %s28 = ssub.s32 %s22, 2
      %s29 = sadd.s32 %s22, 1
      %s30 = ssub.s32 %s22, %s29
      %p31 = scmp.eq.s32.totalorder %s30, 0
      %s33 = sadd.s32 %s32, 1
      %s34 = scalar_select %p31, %s32, %s33
      %p37 = pneg %p31
      %p38 = scmp.eq.s32.totalorder %s22, 1
      %p39 = por %p37, %p38
      %p40 = scmp.ne.s32.totalorder %s32, %s35
      %p41 = scmp.eq.s32.totalorder %s22, 0
      %p42 = por %p40, %p41
      %p43 = scmp.ne.s32.totalorder %s32, %s35
      %p44 = scmp.eq.s32.totalorder %s27, 1
      %p45 = por %p43, %p44
      %p46 = scmp.ne.s32.totalorder %s35, %s36
      %p47 = scmp.eq.s32.totalorder %s27, 0
      %p48 = por %p46, %p47
      %p49 = scmp.ne.s32.totalorder %s35, %s36
      %p50 = scmp.eq.s32.totalorder %s28, 1
      %p51 = por %p49, %p50
      %p53 = scmp.ne.s32.totalorder %s36, %s52
      %p54 = scmp.eq.s32.totalorder %s28, 0
      %p55 = por %p53, %p54
      %s57 = sadd.s32 %s56, 1
      %p60 = scmp.eq.s32.totalorder %s22, 1
      %p61 = scmp.ne.s32.totalorder %s56, %s58
      %p62 = scmp.eq.s32.totalorder %s22, 0
      %p63 = por %p61, %p62
      %p64 = scmp.ne.s32.totalorder %s56, %s58
      %p65 = scmp.eq.s32.totalorder %s27, 1
      %p66 = por %p64, %p65
      %p67 = scmp.ne.s32.totalorder %s58, %s59
      %p68 = scmp.eq.s32.totalorder %s27, 0
      %p69 = por %p67, %p68
      %p70 = scmp.ne.s32.totalorder %s58, %s59
      %p71 = scmp.eq.s32.totalorder %s28, 1
      %p72 = por %p70, %p71
      %p74 = scmp.ne.s32.totalorder %s59, %s73
      %p75 = scmp.eq.s32.totalorder %s28, 0
      %p76 = por %p74, %p75
      %s78 = sadd.s32 %s77, 1
      %p81 = scmp.eq.s32.totalorder %s22, 1
      %p82 = scmp.ne.s32.totalorder %s77, %s79
      %p83 = scmp.eq.s32.totalorder %s22, 0
      %p84 = por %p82, %p83
      %p85 = scmp.ne.s32.totalorder %s77, %s79
      %p86 = scmp.eq.s32.totalorder %s27, 1
      %p87 = por %p85, %p86
      %p88 = scmp.ne.s32.totalorder %s79, %s80
      %p89 = scmp.eq.s32.totalorder %s27, 0
      %p90 = por %p88, %p89
      %p91 = scmp.ne.s32.totalorder %s79, %s80
      %p92 = scmp.eq.s32.totalorder %s28, 1
      %p93 = por %p91, %p92
      %p95 = scmp.ne.s32.totalorder %s80, %s94
      %p96 = scmp.eq.s32.totalorder %s28, 0
      %p97 = por %p95, %p96
      %s99 = sadd.s32 %s98, 1
      %p102 = scmp.eq.s32.totalorder %s22, 1
      %p103 = scmp.ne.s32.totalorder %s98, %s100
      %p104 = scmp.eq.s32.totalorder %s22, 0
      %p105 = por %p103, %p104
      %p106 = scmp.ne.s32.totalorder %s98, %s100
      %p107 = scmp.eq.s32.totalorder %s27, 1
      %p108 = por %p106, %p107
      %p109 = scmp.ne.s32.totalorder %s100, %s101
      %p110 = scmp.eq.s32.totalorder %s27, 0
      %p111 = por %p109, %p110
      %p112 = scmp.ne.s32.totalorder %s100, %s101
      %p113 = scmp.eq.s32.totalorder %s28, 1
      %p114 = por %p112, %p113
      %p116 = scmp.ne.s32.totalorder %s101, %s115
      %p117 = scmp.eq.s32.totalorder %s28, 0
      %p118 = por %p116, %p117
      %s120 = sadd.s32 %s119, 1
      %p123 = scmp.eq.s32.totalorder %s22, 1
      %p124 = scmp.ne.s32.totalorder %s119, %s121
      %p125 = scmp.eq.s32.totalorder %s22, 0
      %p126 = por %p124, %p125
      %p127 = scmp.ne.s32.totalorder %s119, %s121
      %p128 = scmp.eq.s32.totalorder %s27, 1
      %p129 = por %p127, %p128
      %p130 = scmp.ne.s32.totalorder %s121, %s122
      %p131 = scmp.eq.s32.totalorder %s27, 0
      %p132 = por %p130, %p131
      %p133 = scmp.ne.s32.totalorder %s121, %s122
      %p134 = scmp.eq.s32.totalorder %s28, 1
      %p135 = por %p133, %p134
      %p137 = scmp.ne.s32.totalorder %s122, %s136
      %p138 = scmp.eq.s32.totalorder %s28, 0
      %p139 = por %p137, %p138
      %s141 = sadd.s32 %s140, 1
      %p144 = scmp.eq.s32.totalorder %s22, 1
      %p145 = scmp.ne.s32.totalorder %s140, %s142
      %p146 = scmp.eq.s32.totalorder %s22, 0
      %p147 = por %p145, %p146
      %p148 = scmp.ne.s32.totalorder %s140, %s142
      %p149 = scmp.eq.s32.totalorder %s27, 1
      %p150 = por %p148, %p149
      %p151 = scmp.ne.s32.totalorder %s142, %s143
      %p152 = scmp.eq.s32.totalorder %s27, 0
      %p153 = por %p151, %p152
      %p154 = scmp.ne.s32.totalorder %s142, %s143
      %p155 = scmp.eq.s32.totalorder %s28, 1
      %p156 = por %p154, %p155
      %p158 = scmp.ne.s32.totalorder %s143, %s157
      %p159 = scmp.eq.s32.totalorder %s28, 0
      %p160 = por %p158, %p159
      %s162 = sadd.s32 %s161, 1
      %p165 = scmp.eq.s32.totalorder %s22, 1
      %p166 = scmp.ne.s32.totalorder %s161, %s163
      %p167 = scmp.eq.s32.totalorder %s22, 0
      %p168 = por %p166, %p167
      %p169 = scmp.ne.s32.totalorder %s161, %s163
      %p170 = scmp.eq.s32.totalorder %s27, 1
      %p171 = por %p169, %p170
      %p172 = scmp.ne.s32.totalorder %s163, %s164
      %p173 = scmp.eq.s32.totalorder %s27, 0
      %p174 = por %p172, %p173
      %p175 = scmp.ne.s32.totalorder %s163, %s164
      %p176 = scmp.eq.s32.totalorder %s28, 1
      %p177 = por %p175, %p176
      %p179 = scmp.ne.s32.totalorder %s164, %s178
      %p180 = scmp.eq.s32.totalorder %s28, 0
      %p181 = por %p179, %p180
      %s182 = ssub.s32 %s22, %s29
      %p183 = scmp.eq.s32.totalorder %s182, 0
      %s185 = sadd.s32 %s184, 1
      %s186 = scalar_select %p183, %s184, %s185
      %p189 = pneg %p183
      %p190 = scmp.eq.s32.totalorder %s22, 1
      %p191 = por %p189, %p190
      %p192 = scmp.ne.s32.totalorder %s184, %s187
      %p193 = scmp.eq.s32.totalorder %s22, 0
      %p194 = por %p192, %p193
      %p195 = scmp.ne.s32.totalorder %s184, %s187
      %p196 = scmp.eq.s32.totalorder %s27, 1
      %p197 = por %p195, %p196
      %p198 = scmp.ne.s32.totalorder %s187, %s188
      %p199 = scmp.eq.s32.totalorder %s27, 0
      %p200 = por %p198, %p199
      %p201 = scmp.ne.s32.totalorder %s187, %s188
      %p202 = scmp.eq.s32.totalorder %s28, 1
      %p203 = por %p201, %p202
      %p205 = scmp.ne.s32.totalorder %s188, %s204
      %p206 = scmp.eq.s32.totalorder %s28, 0
      %p207 = por %p205, %p206
      %p208 = scmp.le.s32.totalorder 1, %s22
      %p209 = scmp.lt.s32.totalorder %s22, 3
      %p210 = pnand %p208, %p209
      %p211 = pneg %p210
      // Predicated region
      $region9: #{tpu_custom_call.1} parent=5 // pred_check
        _
      $region10: #{tpu_custom_call.1} parent=5 // pred_check_branch
        %213 = sbr.rel (%p210) target = $region12
      $region11: #{tpu_custom_call.1} parent=5 // pred_region
        %s214 = ssub.s32 %s22, 1
        // Predicated region
        $region13: #{tpu_custom_call.1} parent=11 // pred_check
          %p215 = pneg %p69
        $region14: #{tpu_custom_call.1} parent=11 // pred_check_branch
          %217 = sbr.rel (%p215) target = $region16
        $region15: #{tpu_custom_call.1} parent=11 // pred_region
          %s219 = ssub.s32 12544, 12544
          %220 = vsyncadd [#allocation7], %s219
          %s221 = sshll.u32 [#allocation6], 4
          %s222 = int_to_ptr.vmem [resolvable:$true] %s221
          %227 = dma.hbm_to_vmem [thread:$0]  %s1, 12544, %s222, [#allocation7], 128, 128, 8
        $region16: #{tpu_custom_call.1} parent=11 // pred_fallthru
          _
        // Predicated region
        $region17: #{tpu_custom_call.1} parent=11 // pred_check
          %p228 = pneg %p90
        $region18: #{tpu_custom_call.1} parent=11 // pred_check_branch
          %230 = sbr.rel (%p228) target = $region20
        $region19: #{tpu_custom_call.1} parent=11 // pred_region
          _
        $region20: #{tpu_custom_call.1} parent=11 // pred_fallthru
          _
        // Predicated region
        $region21: #{tpu_custom_call.1} parent=11 // pred_check
          %p231 = pneg %p111
        $region22: #{tpu_custom_call.1} parent=11 // pred_check_branch
          %233 = sbr.rel (%p231) target = $region24
        $region23: #{tpu_custom_call.1} parent=11 // pred_region
          %s235 = ssub.s32 4096, 4096
          %236 = vsyncadd [#allocation7], %s235
          %s237 = sshll.u32 [#allocation8], 4
          %s238 = int_to_ptr.vmem [resolvable:$true] %s237
          %243 = dma.hbm_to_vmem [thread:$0]  %s3, 4096, %s238, [#allocation7], 128, 128, 8
        $region24: #{tpu_custom_call.1} parent=11 // pred_fallthru
          _
        // Predicated region
        $region25: #{tpu_custom_call.1} parent=11 // pred_check
          %p244 = pneg %p132
        $region26: #{tpu_custom_call.1} parent=11 // pred_check_branch
          %246 = sbr.rel (%p244) target = $region28
        $region27: #{tpu_custom_call.1} parent=11 // pred_region
          _
        $region28: #{tpu_custom_call.1} parent=11 // pred_fallthru
          _
        // Predicated region
        $region29: #{tpu_custom_call.1} parent=11 // pred_check
          %p247 = pneg %p153
        $region30: #{tpu_custom_call.1} parent=11 // pred_check_branch
          %249 = sbr.rel (%p247) target = $region32
        $region31: #{tpu_custom_call.1} parent=11 // pred_region
          _
        $region32: #{tpu_custom_call.1} parent=11 // pred_fallthru
          _
        // Predicated region
        $region33: #{tpu_custom_call.1} parent=11 // pred_check
          %p250 = pneg %p174
        $region34: #{tpu_custom_call.1} parent=11 // pred_check_branch
          %252 = sbr.rel (%p250) target = $region36
        $region35: #{tpu_custom_call.1} parent=11 // pred_region
          _
        $region36: #{tpu_custom_call.1} parent=11 // pred_fallthru
          _
      $region12: #{tpu_custom_call.1} parent=5 // pred_fallthru
        _
      %p253 = scmp.lt.s32.totalorder %s22, 2
      // Predicated region
      $region37: #{tpu_custom_call.1} parent=5 // pred_check
        %p254 = pneg %p253
      $region38: #{tpu_custom_call.1} parent=5 // pred_check_branch
        %256 = sbr.rel (%p254) target = $region40
      $region39: #{tpu_custom_call.1} parent=5 // pred_region
        // Predicated region
        $region41: #{tpu_custom_call.1} parent=39 // pred_check
          %p257 = pneg %p42
        $region42: #{tpu_custom_call.1} parent=39 // pred_check_branch
          %259 = sbr.rel (%p257) target = $region44
        $region43: #{tpu_custom_call.1} parent=39 // pred_region
          %s260 = sand.u32 %s32, 1
          %s261 = scalar_lea.sflag [#allocation4], %s260
          %s262 = sand.u32 %s32, 1
          %s263 = smul.addr %s262, 896
          %s264 = scalar_lea.vmem [#allocation3], %s263
          %s265 = smul.u32 16, %s22
          %s266 = ssub.s32 25, %s265
          %p267 = scmp.lt.s32.totalorder %s266, 16
          %s268 = scalar_select %p267, %s266, 16
          %s269 = smul.u32 128, %s268
          %s270 = smul.u32 %s269, 7
          %s272 = ssub.s32 14336, %s270
          %273 = vsyncadd %s261, %s272
          %p274 = scmp.ne.s32.totalorder 0, %s270
          %s275 = smul.addr %s265, 7
          %s276 = smul.addr %s275, 128
          %s277 = scalar_lea.hbm %s0, %s276
          %s278 = smul.u32 56, %s268
          %s279 = sshll.u32 %s264, 4
          %s280 = int_to_ptr.vmem [resolvable:$true] %s279
          %s281 = sshll.u32 %s278, 4
          %285 = dma.hbm_to_vmem [thread:$0]  (%p274), %s277, %s281, %s280, %s261, 896, 896, 56
        $region44: #{tpu_custom_call.1} parent=39 // pred_fallthru
          _
      $region40: #{tpu_custom_call.1} parent=5 // pred_fallthru
        _
      %p286 = scmp.le.s32.totalorder 1, %s22
      %p287 = scmp.lt.s32.totalorder %s22, 3
      %p288 = pnand %p286, %p287
      %p289 = pneg %p288
      // Predicated region
      $region45: #{tpu_custom_call.1} parent=5 // pred_check
        _
      $region46: #{tpu_custom_call.1} parent=5 // pred_check_branch
        %291 = sbr.rel (%p288) target = $region48
      $region47: #{tpu_custom_call.1} parent=5 // pred_region
        %s292 = ssub.s32 %s22, 1
        %s293 = sand.u32 %s35, 1
        %s294 = scalar_lea.sflag [#allocation4], %s293
        %s295 = sand.u32 %s35, 1
        %s296 = smul.addr %s295, 896
        %s297 = scalar_lea.vmem [#allocation3], %s296
        // Predicated region
        $region49: #{tpu_custom_call.1} parent=47 // pred_check
          %p298 = pneg %p48
        $region50: #{tpu_custom_call.1} parent=47 // pred_check_branch
          %300 = sbr.rel (%p298) target = $region52
        $region51: #{tpu_custom_call.1} parent=47 // pred_region
          %301 = dma.done %s294, 14336
        $region52: #{tpu_custom_call.1} parent=47 // pred_fallthru
          _
        // Predicated region
        $region53: #{tpu_custom_call.1} parent=47 // pred_check
          %p302 = pneg %p69
        $region54: #{tpu_custom_call.1} parent=47 // pred_check_branch
          %304 = sbr.rel (%p302) target = $region56
        $region55: #{tpu_custom_call.1} parent=47 // pred_region
          %305 = dma.done [#allocation7], 12544
        $region56: #{tpu_custom_call.1} parent=47 // pred_fallthru
          _
        // Predicated region
        $region57: #{tpu_custom_call.1} parent=47 // pred_check
          %p306 = pneg %p111
        $region58: #{tpu_custom_call.1} parent=47 // pred_check_branch
          %308 = sbr.rel (%p306) target = $region60
        $region59: #{tpu_custom_call.1} parent=47 // pred_region
          %309 = dma.done [#allocation7], 4096
        $region60: #{tpu_custom_call.1} parent=47 // pred_fallthru
          _
        %s310 = sand.u32 %s35, 1
        %s311 = scalar_lea.sflag [#allocation4], %s310
        %s312 = sand.u32 %s35, 1
        %s313 = smul.addr %s312, 896
        %s314 = scalar_lea.vmem [#allocation3], %s313
        %p315 = pneg %p48
        %p316 = pneg %p45
        %p317 = pneg %p69
        %p318 = pneg %p66
        %p319 = pneg %p90
        %p320 = pneg %p87
        %p321 = pneg %p111
        %p322 = pneg %p108
        %p323 = pneg %p132
        %p324 = pneg %p129
        %p325 = pneg %p153
        %p326 = pneg %p150
        %p327 = pneg %p174
        %p328 = pneg %p171
        %p329 = pneg %p200
        %p330 = pneg %p197
        %s331 = sand.u32 %s187, 1
        %s332 = scalar_lea.sflag [#allocation5], %s331
        %s333 = sand.u32 %s187, 1
        %s334 = scalar_lea.vmem [#allocation9], %s333
        %s335 = smul.u32 16, %s27
        %s336 = ssub.s32 25, %s335
        %p337 = scmp.lt.s32.totalorder %s336, 16
        %s338 = scalar_select %p337, %s336, 16
        %s339 = smul.u32 128, %s338
        %s340 = smul.u32 %s339, 7
        %v342 = vld [vmem:[%s297] sm:$0xff]
        %v343 = vld [vmem:[%s297 + $0x8] sm:$0xff]
        %v344 = vld [vmem:[%s297 + $0x10] sm:$0xff]
        %v345 = vld [vmem:[%s297 + $0x18] sm:$0xff]
        %v346 = vld [vmem:[%s297 + $0x20] sm:$0xff]
        %v347 = vld [vmem:[%s297 + $0x28] sm:$0xff]
        %v348 = vld [vmem:[%s297 + $0x30] sm:$0xff]
        %v349 = vld [vmem:[%s297 + $0x38] sm:$0xff]
        %v350 = vld [vmem:[%s297 + $0x40] sm:$0xff]
        %v351 = vld [vmem:[%s297 + $0x48] sm:$0xff]
        %v352 = vld [vmem:[%s297 + $0x50] sm:$0xff]
        %v353 = vld [vmem:[%s297 + $0x58] sm:$0xff]
        %v354 = vld [vmem:[%s297 + $0x60] sm:$0xff]
        %v355 = vld [vmem:[%s297 + $0x68] sm:$0xff]
        %v356 = vld [vmem:[%s297 + $0x70] sm:$0xff]
        %v357 = vld [vmem:[%s297 + $0x78] sm:$0xff]
        %v358 = vld [vmem:[%s297 + $0x80] sm:$0xff]
        %v359 = vld [vmem:[%s297 + $0x88] sm:$0xff]
        %v360 = vld [vmem:[%s297 + $0x90] sm:$0xff]
        %v361 = vld [vmem:[%s297 + $0x98] sm:$0xff]
        %v362 = vld [vmem:[%s297 + $0xa0] sm:$0xff]
        %v363 = vld [vmem:[%s297 + $0xa8] sm:$0xff]
        %v364 = vld [vmem:[%s297 + $0xb0] sm:$0xff]
        %v365 = vld [vmem:[%s297 + $0xb8] sm:$0xff]
        %v366 = vld [vmem:[%s297 + $0xc0] sm:$0xff]
        %v367 = vld [vmem:[%s297 + $0xc8] sm:$0xff]
        %v368 = vld [vmem:[%s297 + $0xd0] sm:$0xff]
        %v369 = vld [vmem:[%s297 + $0xd8] sm:$0xff]
        %v370 = vld [vmem:[%s297 + $0xe0] sm:$0xff]
        %v371 = vld [vmem:[%s297 + $0xe8] sm:$0xff]
        %v372 = vld [vmem:[%s297 + $0xf0] sm:$0xff]
        %v373 = vld [vmem:[%s297 + $0xf8] sm:$0xff]
        %v374 = vld [vmem:[%s297 + $0x100] sm:$0xff]
        %v375 = vld [vmem:[%s297 + $0x108] sm:$0xff]
        %v376 = vld [vmem:[%s297 + $0x110] sm:$0xff]
        %v377 = vld [vmem:[%s297 + $0x118] sm:$0xff]
        %v378 = vld [vmem:[%s297 + $0x120] sm:$0xff]
        %v379 = vld [vmem:[%s297 + $0x128] sm:$0xff]
        %v380 = vld [vmem:[%s297 + $0x130] sm:$0xff]
        %v381 = vld [vmem:[%s297 + $0x138] sm:$0xff]
        %v382 = vld [vmem:[%s297 + $0x140] sm:$0xff]
        %v383 = vld [vmem:[%s297 + $0x148] sm:$0xff]
        %v384 = vld [vmem:[%s297 + $0x150] sm:$0xff]
        %v385 = vld [vmem:[%s297 + $0x158] sm:$0xff]
        %v386 = vld [vmem:[%s297 + $0x160] sm:$0xff]
        %v387 = vld [vmem:[%s297 + $0x168] sm:$0xff]
        %v388 = vld [vmem:[%s297 + $0x170] sm:$0xff]
        %v389 = vld [vmem:[%s297 + $0x178] sm:$0xff]
        %v390 = vld [vmem:[%s297 + $0x180] sm:$0xff]
        %v391 = vld [vmem:[%s297 + $0x188] sm:$0xff]
        %v392 = vld [vmem:[%s297 + $0x190] sm:$0xff]
        %v393 = vld [vmem:[%s297 + $0x198] sm:$0xff]
        %v394 = vld [vmem:[%s297 + $0x1a0] sm:$0xff]
        %v395 = vld [vmem:[%s297 + $0x1a8] sm:$0xff]
        %v396 = vld [vmem:[%s297 + $0x1b0] sm:$0xff]
        %v397 = vld [vmem:[%s297 + $0x1b8] sm:$0xff]
        %v398 = vld [vmem:[%s297 + $0x1c0] sm:$0xff]
        %v399 = vld [vmem:[%s297 + $0x1c8] sm:$0xff]
        %v400 = vld [vmem:[%s297 + $0x1d0] sm:$0xff]
        %v401 = vld [vmem:[%s297 + $0x1d8] sm:$0xff]
        %v402 = vld [vmem:[%s297 + $0x1e0] sm:$0xff]
        %v403 = vld [vmem:[%s297 + $0x1e8] sm:$0xff]
        %v404 = vld [vmem:[%s297 + $0x1f0] sm:$0xff]
        %v405 = vld [vmem:[%s297 + $0x1f8] sm:$0xff]
        %v406 = vld [vmem:[%s297 + $0x200] sm:$0xff]
        %v407 = vld [vmem:[%s297 + $0x208] sm:$0xff]
        %v408 = vld [vmem:[%s297 + $0x210] sm:$0xff]
        %v409 = vld [vmem:[%s297 + $0x218] sm:$0xff]
        %v410 = vld [vmem:[%s297 + $0x220] sm:$0xff]
        %v411 = vld [vmem:[%s297 + $0x228] sm:$0xff]
        %v412 = vld [vmem:[%s297 + $0x230] sm:$0xff]
        %v413 = vld [vmem:[%s297 + $0x238] sm:$0xff]
        %v414 = vld [vmem:[%s297 + $0x240] sm:$0xff]
        %v415 = vld [vmem:[%s297 + $0x248] sm:$0xff]
        %v416 = vld [vmem:[%s297 + $0x250] sm:$0xff]
        %v417 = vld [vmem:[%s297 + $0x258] sm:$0xff]
        %v418 = vld [vmem:[%s297 + $0x260] sm:$0xff]
        %v419 = vld [vmem:[%s297 + $0x268] sm:$0xff]
        %v420 = vld [vmem:[%s297 + $0x270] sm:$0xff]
        %v421 = vld [vmem:[%s297 + $0x278] sm:$0xff]
        %v422 = vld [vmem:[%s297 + $0x280] sm:$0xff]
        %v423 = vld [vmem:[%s297 + $0x288] sm:$0xff]
        %v424 = vld [vmem:[%s297 + $0x290] sm:$0xff]
        %v425 = vld [vmem:[%s297 + $0x298] sm:$0xff]
        %v426 = vld [vmem:[%s297 + $0x2a0] sm:$0xff]
        %v427 = vld [vmem:[%s297 + $0x2a8] sm:$0xff]
        %v428 = vld [vmem:[%s297 + $0x2b0] sm:$0xff]
        %v429 = vld [vmem:[%s297 + $0x2b8] sm:$0xff]
        %v430 = vld [vmem:[%s297 + $0x2c0] sm:$0xff]
        %v431 = vld [vmem:[%s297 + $0x2c8] sm:$0xff]
        %v432 = vld [vmem:[%s297 + $0x2d0] sm:$0xff]
        %v433 = vld [vmem:[%s297 + $0x2d8] sm:$0xff]
        %v434 = vld [vmem:[%s297 + $0x2e0] sm:$0xff]
        %v435 = vld [vmem:[%s297 + $0x2e8] sm:$0xff]
        %v436 = vld [vmem:[%s297 + $0x2f0] sm:$0xff]
        %v437 = vld [vmem:[%s297 + $0x2f8] sm:$0xff]
        %v438 = vld [vmem:[%s297 + $0x300] sm:$0xff]
        %v439 = vld [vmem:[%s297 + $0x308] sm:$0xff]
        %v440 = vld [vmem:[%s297 + $0x310] sm:$0xff]
        %v441 = vld [vmem:[%s297 + $0x318] sm:$0xff]
        %v442 = vld [vmem:[%s297 + $0x320] sm:$0xff]
        %v443 = vld [vmem:[%s297 + $0x328] sm:$0xff]
        %v444 = vld [vmem:[%s297 + $0x330] sm:$0xff]
        %v445 = vld [vmem:[%s297 + $0x338] sm:$0xff]
        %v446 = vld [vmem:[%s297 + $0x340] sm:$0xff]
        %v447 = vld [vmem:[%s297 + $0x348] sm:$0xff]
        %v448 = vld [vmem:[%s297 + $0x350] sm:$0xff]
        %v449 = vld [vmem:[%s297 + $0x358] sm:$0xff]
        %v450 = vld [vmem:[%s297 + $0x360] sm:$0xff]
        %v451 = vld [vmem:[%s297 + $0x368] sm:$0xff]
        %v452 = vld [vmem:[%s297 + $0x370] sm:$0xff]
        %v453 = vld [vmem:[%s297 + $0x378] sm:$0xff]
        %v454 = vpack.c.bf16 %v349, %v342
        %v455 = vpack.c.bf16 %v350, %v343
        %v456 = vpack.c.bf16 %v351, %v344
        %v457 = vpack.c.bf16 %v352, %v345
        %v458 = vpack.c.bf16 %v353, %v346
        %v459 = vpack.c.bf16 %v354, %v347
        %v460 = vpack.c.bf16 %v355, %v348
        %v461 = vpack.c.bf16 %v363, %v356
        %v462 = vpack.c.bf16 %v364, %v357
        %v463 = vpack.c.bf16 %v365, %v358
        %v464 = vpack.c.bf16 %v366, %v359
        %v465 = vpack.c.bf16 %v367, %v360
        %v466 = vpack.c.bf16 %v368, %v361
        %v467 = vpack.c.bf16 %v369, %v362
        %v468 = vpack.c.bf16 %v377, %v370
        %v469 = vpack.c.bf16 %v378, %v371
        %v470 = vpack.c.bf16 %v379, %v372
        %v471 = vpack.c.bf16 %v380, %v373
        %v472 = vpack.c.bf16 %v381, %v374
        %v473 = vpack.c.bf16 %v382, %v375
        %v474 = vpack.c.bf16 %v383, %v376
        %v475 = vpack.c.bf16 %v391, %v384
        %v476 = vpack.c.bf16 %v392, %v385
        %v477 = vpack.c.bf16 %v393, %v386
        %v478 = vpack.c.bf16 %v394, %v387
        %v479 = vpack.c.bf16 %v395, %v388
        %v480 = vpack.c.bf16 %v396, %v389
        %v481 = vpack.c.bf16 %v397, %v390
        %v482 = vpack.c.bf16 %v405, %v398
        %v483 = vpack.c.bf16 %v406, %v399
        %v484 = vpack.c.bf16 %v407, %v400
        %v485 = vpack.c.bf16 %v408, %v401
        %v486 = vpack.c.bf16 %v409, %v402
        %v487 = vpack.c.bf16 %v410, %v403
        %v488 = vpack.c.bf16 %v411, %v404
        %v489 = vpack.c.bf16 %v419, %v412
        %v490 = vpack.c.bf16 %v420, %v413
        %v491 = vpack.c.bf16 %v421, %v414
        %v492 = vpack.c.bf16 %v422, %v415
        %v493 = vpack.c.bf16 %v423, %v416
        %v494 = vpack.c.bf16 %v424, %v417
        %v495 = vpack.c.bf16 %v425, %v418
        %v496 = vpack.c.bf16 %v433, %v426
        %v497 = vpack.c.bf16 %v434, %v427
        %v498 = vpack.c.bf16 %v435, %v428
        %v499 = vpack.c.bf16 %v436, %v429
        %v500 = vpack.c.bf16 %v437, %v430
        %v501 = vpack.c.bf16 %v438, %v431
        %v502 = vpack.c.bf16 %v439, %v432
        %v503 = vpack.c.bf16 %v447, %v440
        %v504 = vpack.c.bf16 %v448, %v441
        %v505 = vpack.c.bf16 %v449, %v442
        %v506 = vpack.c.bf16 %v450, %v443
        %v507 = vpack.c.bf16 %v451, %v444
        %v508 = vpack.c.bf16 %v452, %v445
        %v509 = vpack.c.bf16 %v453, %v446
        %v510 = vld [vmem:[#allocation6] sm:$0xff]
        %v511 = vld [vmem:[#allocation6 + $0x8] sm:$0xff]
        %v512 = vld [vmem:[#allocation6 + $0x10] sm:$0xff]
        %v513 = vld [vmem:[#allocation6 + $0x18] sm:$0xff]
        %v514 = vld [vmem:[#allocation6 + $0x20] sm:$0xff]
        %v515 = vld [vmem:[#allocation6 + $0x28] sm:$0xff]
        %v516 = vld [vmem:[#allocation6 + $0x30] sm:$0xff]
        %v517 = vld [vmem:[#allocation6 + $0x38] sm:$0xff]
        %v518 = vld [vmem:[#allocation6 + $0x40] sm:$0xff]
        %v519 = vld [vmem:[#allocation6 + $0x48] sm:$0xff]
        %v520 = vld [vmem:[#allocation6 + $0x50] sm:$0xff]
        %v521 = vld [vmem:[#allocation6 + $0x58] sm:$0xff]
        %v522 = vld [vmem:[#allocation6 + $0x60] sm:$0xff]
        %v523 = vld [vmem:[#allocation6 + $0x68] sm:$0xff]
        %v524 = vld [vmem:[#allocation6 + $0x70] sm:$0xff]
        %v525 = vld [vmem:[#allocation6 + $0x78] sm:$0xff]
        %v526 = vld [vmem:[#allocation6 + $0x80] sm:$0xff]
        %v527 = vld [vmem:[#allocation6 + $0x88] sm:$0xff]
        %v528 = vld [vmem:[#allocation6 + $0x90] sm:$0xff]
        %v529 = vld [vmem:[#allocation6 + $0x98] sm:$0xff]
        %v530 = vld [vmem:[#allocation6 + $0xa0] sm:$0xff]
        %v531 = vld [vmem:[#allocation6 + $0xa8] sm:$0xff]
        %v532 = vld [vmem:[#allocation6 + $0xb0] sm:$0xff]
        %v533 = vld [vmem:[#allocation6 + $0xb8] sm:$0xff]
        %v534 = vld [vmem:[#allocation6 + $0xc0] sm:$0xff]
        %v535 = vld [vmem:[#allocation6 + $0xc8] sm:$0xff]
        %v536 = vld [vmem:[#allocation6 + $0xd0] sm:$0xff]
        %v537 = vld [vmem:[#allocation6 + $0xd8] sm:$0xff]
        %v538 = vld [vmem:[#allocation6 + $0xe0] sm:$0xff]
        %v539 = vld [vmem:[#allocation6 + $0xe8] sm:$0xff]
        %v540 = vld [vmem:[#allocation6 + $0xf0] sm:$0xff]
        %v541 = vld [vmem:[#allocation6 + $0xf8] sm:$0xff]
        %v542 = vld [vmem:[#allocation6 + $0x100] sm:$0xff]
        %v543 = vld [vmem:[#allocation6 + $0x108] sm:$0xff]
        %v544 = vld [vmem:[#allocation6 + $0x110] sm:$0xff]
        %v545 = vld [vmem:[#allocation6 + $0x118] sm:$0xff]
        %v546 = vld [vmem:[#allocation6 + $0x120] sm:$0xff]
        %v547 = vld [vmem:[#allocation6 + $0x128] sm:$0xff]
        %v548 = vld [vmem:[#allocation6 + $0x130] sm:$0xff]
        %v549 = vld [vmem:[#allocation6 + $0x138] sm:$0xff]
        %v550 = vld [vmem:[#allocation6 + $0x140] sm:$0xff]
        %v551 = vld [vmem:[#allocation6 + $0x148] sm:$0xff]
        %v552 = vld [vmem:[#allocation6 + $0x150] sm:$0xff]
        %v553 = vld [vmem:[#allocation6 + $0x158] sm:$0xff]
        %v554 = vld [vmem:[#allocation6 + $0x160] sm:$0xff]
        %v555 = vld [vmem:[#allocation6 + $0x168] sm:$0xff]
        %v556 = vld [vmem:[#allocation6 + $0x170] sm:$0xff]
        %v557 = vld [vmem:[#allocation6 + $0x178] sm:$0xff]
        %v558 = vld [vmem:[#allocation6 + $0x180] sm:$0xff]
        %v559 = vld [vmem:[#allocation6 + $0x188] sm:$0xff]
        %v560 = vld [vmem:[#allocation6 + $0x190] sm:$0xff]
        %v561 = vld [vmem:[#allocation6 + $0x198] sm:$0xff]
        %v562 = vld [vmem:[#allocation6 + $0x1a0] sm:$0xff]
        %v563 = vld [vmem:[#allocation6 + $0x1a8] sm:$0xff]
        %v564 = vld [vmem:[#allocation6 + $0x1b0] sm:$0xff]
        %v565 = vld [vmem:[#allocation6 + $0x1b8] sm:$0xff]
        %v566 = vld [vmem:[#allocation6 + $0x1c0] sm:$0xff]
        %v567 = vld [vmem:[#allocation6 + $0x1c8] sm:$0xff]
        %v568 = vld [vmem:[#allocation6 + $0x1d0] sm:$0xff]
        %v569 = vld [vmem:[#allocation6 + $0x1d8] sm:$0xff]
        %v570 = vld [vmem:[#allocation6 + $0x1e0] sm:$0xff]
        %v571 = vld [vmem:[#allocation6 + $0x1e8] sm:$0xff]
        %v572 = vld [vmem:[#allocation6 + $0x1f0] sm:$0xff]
        %v573 = vld [vmem:[#allocation6 + $0x1f8] sm:$0xff]
        %v574 = vld [vmem:[#allocation6 + $0x200] sm:$0xff]
        %v575 = vld [vmem:[#allocation6 + $0x208] sm:$0xff]
        %v576 = vld [vmem:[#allocation6 + $0x210] sm:$0xff]
        %v577 = vld [vmem:[#allocation6 + $0x218] sm:$0xff]
        %v578 = vld [vmem:[#allocation6 + $0x220] sm:$0xff]
        %v579 = vld [vmem:[#allocation6 + $0x228] sm:$0xff]
        %v580 = vld [vmem:[#allocation6 + $0x230] sm:$0xff]
        %v581 = vld [vmem:[#allocation6 + $0x238] sm:$0xff]
        %v582 = vld [vmem:[#allocation6 + $0x240] sm:$0xff]
        %v583 = vld [vmem:[#allocation6 + $0x248] sm:$0xff]
        %v584 = vld [vmem:[#allocation6 + $0x250] sm:$0xff]
        %v585 = vld [vmem:[#allocation6 + $0x258] sm:$0xff]
        %v586 = vld [vmem:[#allocation6 + $0x260] sm:$0xff]
        %v587 = vld [vmem:[#allocation6 + $0x268] sm:$0xff]
        %v588 = vld [vmem:[#allocation6 + $0x270] sm:$0xff]
        %v589 = vld [vmem:[#allocation6 + $0x278] sm:$0xff]
        %v590 = vld [vmem:[#allocation6 + $0x280] sm:$0xff]
        %v591 = vld [vmem:[#allocation6 + $0x288] sm:$0xff]
        %v592 = vld [vmem:[#allocation6 + $0x290] sm:$0xff]
        %v593 = vld [vmem:[#allocation6 + $0x298] sm:$0xff]
        %v594 = vld [vmem:[#allocation6 + $0x2a0] sm:$0xff]
        %v595 = vld [vmem:[#allocation6 + $0x2a8] sm:$0xff]
        %v596 = vld [vmem:[#allocation6 + $0x2b0] sm:$0xff]
        %v597 = vld [vmem:[#allocation6 + $0x2b8] sm:$0xff]
        %v598 = vld [vmem:[#allocation6 + $0x2c0] sm:$0xff]
        %v599 = vld [vmem:[#allocation6 + $0x2c8] sm:$0xff]
        %v600 = vld [vmem:[#allocation6 + $0x2d0] sm:$0xff]
        %v601 = vld [vmem:[#allocation6 + $0x2d8] sm:$0xff]
        %v602 = vld [vmem:[#allocation6 + $0x2e0] sm:$0xff]
        %v603 = vld [vmem:[#allocation6 + $0x2e8] sm:$0xff]
        %v604 = vld [vmem:[#allocation6 + $0x2f0] sm:$0xff]
        %v605 = vld [vmem:[#allocation6 + $0x2f8] sm:$0xff]
        %v606 = vld [vmem:[#allocation6 + $0x300] sm:$0xff]
        %v607 = vld [vmem:[#allocation6 + $0x308] sm:$0xff]
        %v608 = vld [vmem:[%s2] sm:$0x3]
        %v610 = vlaneseq
        %v611 = vshrl.u32 %v610, 7
        %v612 = vsub.s32 0, %v611
        %v613 = vrot.slane %v608, %v612
        %v614 = vlaneseq
        %v615 = vshrl.u32 %v614, 7
        %v616 = vsub.s32 1, %v615
        %v617 = vrot.slane %v608, %v616
        %v718 = vunpack.c.l.b16 %v510
        %v719 = vunpack.c.h.b16 %v510
        %v720 = vunpack.c.l.b16 %v511
        %v721 = vunpack.c.h.b16 %v511
        %v722 = vunpack.c.l.b16 %v512
        %v723 = vunpack.c.h.b16 %v512
        %v724 = vunpack.c.l.b16 %v513
        %v725 = vunpack.c.h.b16 %v513
        %v726 = vunpack.c.l.b16 %v514
        %v727 = vunpack.c.h.b16 %v514
        %v728 = vunpack.c.l.b16 %v515
        %v729 = vunpack.c.h.b16 %v515
        %v730 = vunpack.c.l.b16 %v516
        %v731 = vunpack.c.h.b16 %v516
        %v732 = vunpack.c.l.b16 %v517
        %v733 = vunpack.c.h.b16 %v517
        %v734 = vunpack.c.l.b16 %v518
        %v735 = vunpack.c.h.b16 %v518
        %v736 = vunpack.c.l.b16 %v519
        %v737 = vunpack.c.h.b16 %v519
        %v738 = vunpack.c.l.b16 %v520
        %v739 = vunpack.c.h.b16 %v520
        %v740 = vunpack.c.l.b16 %v521
        %v741 = vunpack.c.h.b16 %v521
        %v742 = vunpack.c.l.b16 %v522
        %v743 = vunpack.c.h.b16 %v522
        %v744 = vunpack.c.l.b16 %v523
        %v745 = vunpack.c.h.b16 %v523
        %v746 = vunpack.c.l.b16 %v524
        %v747 = vunpack.c.h.b16 %v524
        %v748 = vunpack.c.l.b16 %v525
        %v749 = vunpack.c.h.b16 %v525
        %v750 = vunpack.c.l.b16 %v526
        %v751 = vunpack.c.h.b16 %v526
        %v752 = vunpack.c.l.b16 %v527
        %v753 = vunpack.c.h.b16 %v527
        %v754 = vunpack.c.l.b16 %v528
        %v755 = vunpack.c.h.b16 %v528
        %v756 = vunpack.c.l.b16 %v529
        %v757 = vunpack.c.h.b16 %v529
        %v758 = vunpack.c.l.b16 %v530
        %v759 = vunpack.c.h.b16 %v530
        %v760 = vunpack.c.l.b16 %v531
        %v761 = vunpack.c.h.b16 %v531
        %v762 = vunpack.c.l.b16 %v532
        %v763 = vunpack.c.h.b16 %v532
        %v764 = vunpack.c.l.b16 %v533
        %v765 = vunpack.c.h.b16 %v533
        %v766 = vunpack.c.l.b16 %v534
        %v767 = vunpack.c.h.b16 %v534
        %v768 = vunpack.c.l.b16 %v535
        %v769 = vunpack.c.h.b16 %v535
        %v770 = vunpack.c.l.b16 %v536
        %v771 = vunpack.c.h.b16 %v536
        %v772 = vunpack.c.l.b16 %v537
        %v773 = vunpack.c.h.b16 %v537
        %v774 = vunpack.c.l.b16 %v538
        %v775 = vunpack.c.h.b16 %v538
        %v776 = vunpack.c.l.b16 %v539
        %v777 = vunpack.c.h.b16 %v539
        %v778 = vunpack.c.l.b16 %v540
        %v779 = vunpack.c.h.b16 %v540
        %v780 = vunpack.c.l.b16 %v541
        %v781 = vunpack.c.h.b16 %v541
        %v782 = vunpack.c.l.b16 %v542
        %v783 = vunpack.c.h.b16 %v542
        %v784 = vunpack.c.l.b16 %v543
        %v785 = vunpack.c.h.b16 %v543
        %v786 = vunpack.c.l.b16 %v544
        %v787 = vunpack.c.h.b16 %v544
        %v788 = vunpack.c.l.b16 %v545
        %v789 = vunpack.c.h.b16 %v545
        %v790 = vunpack.c.l.b16 %v546
        %v791 = vunpack.c.h.b16 %v546
        %v792 = vunpack.c.l.b16 %v547
        %v793 = vunpack.c.h.b16 %v547
        %v794 = vunpack.c.l.b16 %v548
        %v795 = vunpack.c.h.b16 %v548
        %v796 = vunpack.c.l.b16 %v549
        %v797 = vunpack.c.h.b16 %v549
        %v798 = vunpack.c.l.b16 %v550
        %v799 = vunpack.c.h.b16 %v550
        %v800 = vunpack.c.l.b16 %v551
        %v801 = vunpack.c.h.b16 %v551
        %v802 = vunpack.c.l.b16 %v552
        %v803 = vunpack.c.h.b16 %v552
        %v804 = vunpack.c.l.b16 %v553
        %v805 = vunpack.c.h.b16 %v553
        %v806 = vunpack.c.l.b16 %v554
        %v807 = vunpack.c.h.b16 %v554
        %v808 = vunpack.c.l.b16 %v555
        %v809 = vunpack.c.h.b16 %v555
        %v810 = vunpack.c.l.b16 %v556
        %v811 = vunpack.c.h.b16 %v556
        %v812 = vunpack.c.l.b16 %v557
        %v813 = vunpack.c.h.b16 %v557
        %v814 = vunpack.c.l.b16 %v558
        %v815 = vunpack.c.h.b16 %v558
        %v816 = vunpack.c.l.b16 %v559
        %v817 = vunpack.c.h.b16 %v559
        %v818 = vunpack.c.l.b16 %v560
        %v819 = vunpack.c.h.b16 %v560
        %v820 = vunpack.c.l.b16 %v561
        %v821 = vunpack.c.h.b16 %v561
        %v822 = vunpack.c.l.b16 %v562
        %v823 = vunpack.c.h.b16 %v562
        %v824 = vunpack.c.l.b16 %v563
        %v825 = vunpack.c.h.b16 %v563
        %v826 = vunpack.c.l.b16 %v564
        %v827 = vunpack.c.h.b16 %v564
        %v828 = vunpack.c.l.b16 %v565
        %v829 = vunpack.c.h.b16 %v565
        %v830 = vunpack.c.l.b16 %v566
        %v831 = vunpack.c.h.b16 %v566
        %v832 = vunpack.c.l.b16 %v567
        %v833 = vunpack.c.h.b16 %v567
        %v834 = vunpack.c.l.b16 %v568
        %v835 = vunpack.c.h.b16 %v568
        %v836 = vunpack.c.l.b16 %v569
        %v837 = vunpack.c.h.b16 %v569
        %v838 = vunpack.c.l.b16 %v570
        %v839 = vunpack.c.h.b16 %v570
        %v840 = vunpack.c.l.b16 %v571
        %v841 = vunpack.c.h.b16 %v571
        %v842 = vunpack.c.l.b16 %v572
        %v843 = vunpack.c.h.b16 %v572
        %v844 = vunpack.c.l.b16 %v573
        %v845 = vunpack.c.h.b16 %v573
        %v846 = vunpack.c.l.b16 %v574
        %v847 = vunpack.c.h.b16 %v574
        %v848 = vunpack.c.l.b16 %v575
        %v849 = vunpack.c.h.b16 %v575
        %v850 = vunpack.c.l.b16 %v576
        %v851 = vunpack.c.h.b16 %v576
        %v852 = vunpack.c.l.b16 %v577
        %v853 = vunpack.c.h.b16 %v577
        %v854 = vunpack.c.l.b16 %v578
        %v855 = vunpack.c.h.b16 %v578
        %v856 = vunpack.c.l.b16 %v579
        %v857 = vunpack.c.h.b16 %v579
        %v858 = vunpack.c.l.b16 %v580
        %v859 = vunpack.c.h.b16 %v580
        %v860 = vunpack.c.l.b16 %v581
        %v861 = vunpack.c.h.b16 %v581
        %v862 = vunpack.c.l.b16 %v582
        %v863 = vunpack.c.h.b16 %v582
        %v864 = vunpack.c.l.b16 %v583
        %v865 = vunpack.c.h.b16 %v583
        %v866 = vunpack.c.l.b16 %v584
        %v867 = vunpack.c.h.b16 %v584
        %v868 = vunpack.c.l.b16 %v585
        %v869 = vunpack.c.h.b16 %v585
        %v870 = vunpack.c.l.b16 %v586
        %v871 = vunpack.c.h.b16 %v586
        %v872 = vunpack.c.l.b16 %v587
        %v873 = vunpack.c.h.b16 %v587
        %v874 = vunpack.c.l.b16 %v588
        %v875 = vunpack.c.h.b16 %v588
        %v876 = vunpack.c.l.b16 %v589
        %v877 = vunpack.c.h.b16 %v589
        %v878 = vunpack.c.l.b16 %v590
        %v879 = vunpack.c.h.b16 %v590
        %v880 = vunpack.c.l.b16 %v591
        %v881 = vunpack.c.h.b16 %v591
        %v882 = vunpack.c.l.b16 %v592
        %v883 = vunpack.c.h.b16 %v592
        %v884 = vunpack.c.l.b16 %v593
        %v885 = vunpack.c.h.b16 %v593
        %v886 = vunpack.c.l.b16 %v594
        %v887 = vunpack.c.h.b16 %v594
        %v888 = vunpack.c.l.b16 %v595
        %v889 = vunpack.c.h.b16 %v595
        %v890 = vunpack.c.l.b16 %v596
        %v891 = vunpack.c.h.b16 %v596
        %v892 = vunpack.c.l.b16 %v597
        %v893 = vunpack.c.h.b16 %v597
        %v894 = vunpack.c.l.b16 %v598
        %v895 = vunpack.c.h.b16 %v598
        %v896 = vunpack.c.l.b16 %v599
        %v897 = vunpack.c.h.b16 %v599
        %v898 = vunpack.c.l.b16 %v600
        %v899 = vunpack.c.h.b16 %v600
        %v900 = vunpack.c.l.b16 %v601
        %v901 = vunpack.c.h.b16 %v601
        %v902 = vunpack.c.l.b16 %v602
        %v903 = vunpack.c.h.b16 %v602
        %v904 = vunpack.c.l.b16 %v603
        %v905 = vunpack.c.h.b16 %v603
        %v906 = vunpack.c.l.b16 %v604
        %v907 = vunpack.c.h.b16 %v604
        %v908 = vunpack.c.l.b16 %v605
        %v909 = vunpack.c.h.b16 %v605
        %v910 = vunpack.c.l.b16 %v606
        %v911 = vunpack.c.h.b16 %v606
        %v912 = vunpack.c.l.b16 %v607
        %v913 = vunpack.c.h.b16 %v607
        %v914 = vpack.c.b16 %v720, %v718
        %v915 = vpack.c.b16 %v721, %v719
        %v916 = vpack.c.b16 %v724, %v722
        %v917 = vpack.c.b16 %v725, %v723
        %v918 = vpack.c.b16 %v728, %v726
        %v919 = vpack.c.b16 %v729, %v727
        %v920 = vpack.c.b16 %v732, %v730
        %v921 = vpack.c.b16 %v733, %v731
        %v922 = vpack.c.b16 %v736, %v734
        %v923 = vpack.c.b16 %v737, %v735
        %v924 = vpack.c.b16 %v740, %v738
        %v925 = vpack.c.b16 %v741, %v739
        %v926 = vpack.c.b16 %v744, %v742
        %v927 = vpack.c.b16 %v745, %v743
        %v928 = vpack.c.b16 %v748, %v746
        %v929 = vpack.c.b16 %v749, %v747
        %v930 = vpack.c.b16 %v752, %v750
        %v931 = vpack.c.b16 %v753, %v751
        %v932 = vpack.c.b16 %v756, %v754
        %v933 = vpack.c.b16 %v757, %v755
        %v934 = vpack.c.b16 %v760, %v758
        %v935 = vpack.c.b16 %v761, %v759
        %v936 = vpack.c.b16 %v764, %v762
        %v937 = vpack.c.b16 %v765, %v763
        %v938 = vpack.c.b16 %v768, %v766
        %v939 = vpack.c.b16 %v769, %v767
        %v940 = vpack.c.b16 %v772, %v770
        %v941 = vpack.c.b16 %v773, %v771
        %v942 = vpack.c.b16 %v776, %v774
        %v943 = vpack.c.b16 %v777, %v775
        %v944 = vpack.c.b16 %v780, %v778
        %v945 = vpack.c.b16 %v781, %v779
        %v946 = vpack.c.b16 %v784, %v782
        %v947 = vpack.c.b16 %v785, %v783
        %v948 = vpack.c.b16 %v788, %v786
        %v949 = vpack.c.b16 %v789, %v787
        %v950 = vpack.c.b16 %v792, %v790
        %v951 = vpack.c.b16 %v793, %v791
        %v952 = vpack.c.b16 %v796, %v794
        %v953 = vpack.c.b16 %v797, %v795
        %v954 = vpack.c.b16 %v800, %v798
        %v955 = vpack.c.b16 %v801, %v799
        %v956 = vpack.c.b16 %v804, %v802
        %v957 = vpack.c.b16 %v805, %v803
        %v958 = vpack.c.b16 %v808, %v806
        %v959 = vpack.c.b16 %v809, %v807
        %v960 = vpack.c.b16 %v812, %v810
        %v961 = vpack.c.b16 %v813, %v811
        %v962 = vpack.c.b16 %v816, %v814
        %v963 = vpack.c.b16 %v817, %v815
        %v964 = vpack.c.b16 %v820, %v818
        %v965 = vpack.c.b16 %v821, %v819
        %v966 = vpack.c.b16 %v824, %v822
        %v967 = vpack.c.b16 %v825, %v823
        %v968 = vpack.c.b16 %v828, %v826
        %v969 = vpack.c.b16 %v829, %v827
        %v970 = vpack.c.b16 %v832, %v830
        %v971 = vpack.c.b16 %v833, %v831
        %v972 = vpack.c.b16 %v836, %v834
        %v973 = vpack.c.b16 %v837, %v835
        %v974 = vpack.c.b16 %v840, %v838
        %v975 = vpack.c.b16 %v841, %v839
        %v976 = vpack.c.b16 %v844, %v842
        %v977 = vpack.c.b16 %v845, %v843
        %v978 = vpack.c.b16 %v848, %v846
        %v979 = vpack.c.b16 %v849, %v847
        %v980 = vpack.c.b16 %v852, %v850
        %v981 = vpack.c.b16 %v853, %v851
        %v982 = vpack.c.b16 %v856, %v854
        %v983 = vpack.c.b16 %v857, %v855
        %v984 = vpack.c.b16 %v860, %v858
        %v985 = vpack.c.b16 %v861, %v859
        %v986 = vpack.c.b16 %v864, %v862
        %v987 = vpack.c.b16 %v865, %v863
        %v988 = vpack.c.b16 %v868, %v866
        %v989 = vpack.c.b16 %v869, %v867
        %v990 = vpack.c.b16 %v872, %v870
        %v991 = vpack.c.b16 %v873, %v871
        %v992 = vpack.c.b16 %v876, %v874
        %v993 = vpack.c.b16 %v877, %v875
        %v994 = vpack.c.b16 %v880, %v878
        %v995 = vpack.c.b16 %v881, %v879
        %v996 = vpack.c.b16 %v884, %v882
        %v997 = vpack.c.b16 %v885, %v883
        %v998 = vpack.c.b16 %v888, %v886
        %v999 = vpack.c.b16 %v889, %v887
        %v1000 = vpack.c.b16 %v892, %v890
        %v1001 = vpack.c.b16 %v893, %v891
        %v1002 = vpack.c.b16 %v896, %v894
        %v1003 = vpack.c.b16 %v897, %v895
        %v1004 = vpack.c.b16 %v900, %v898
        %v1005 = vpack.c.b16 %v901, %v899
        %v1006 = vpack.c.b16 %v904, %v902
        %v1007 = vpack.c.b16 %v905, %v903
        %v1008 = vpack.c.b16 %v908, %v906
        %v1009 = vpack.c.b16 %v909, %v907
        %v1010 = vpack.c.b16 %v912, %v910
        %v1011 = vpack.c.b16 %v913, %v911
        %vm1110 = vcmask 130048
        %v1112 = vsel %vm1110, %v460, 0
        %v1115 = vsel %vm1110, %v467, 0
        %v1118 = vsel %vm1110, %v474, 0
        %v1121 = vsel %vm1110, %v481, 0
        %v1124 = vsel %vm1110, %v488, 0
        %v1127 = vsel %vm1110, %v495, 0
        %v1130 = vsel %vm1110, %v502, 0
        %v1133 = vsel %vm1110, %v509, 0
        %1135 = vmatprep.subr.bf16.mxu0 %v915
        %1136 = vmatpush1.bf16.msra.mxu0 %v914
        %1137 = vmatprep.subr.bf16.mxu0 %v917
        %1138 = vmatpush1.bf16.msra.mxu0 %v916
        %1139 = vmatprep.subr.bf16.mxu0 %v919
        %1140 = vmatpush1.bf16.msra.mxu0 %v918
        %1141 = vmatprep.subr.bf16.mxu0 %v921
        %1142 = vmatpush1.bf16.msra.mxu0 %v920
        %1143 = vmatprep.subr.bf16.mxu0 %v923
        %1144 = vmatpush1.bf16.msra.mxu0 %v922
        %1145 = vmatprep.subr.bf16.mxu0 %v925
        %1146 = vmatpush1.bf16.msra.mxu0 %v924
        %1147 = vmatprep.subr.bf16.mxu0 %v927
        %1148 = vmatpush1.bf16.msra.mxu0 %v926
        %1149 = vmatprep.subr.bf16.mxu0 %v929
        %1150 = vmatpush1.bf16.msra.mxu0 %v928
        %1151 = vmatprep.subr.bf16.mxu0 %v931
        %1152 = vmatpush1.bf16.msra.mxu0 %v930
        %1153 = vmatprep.subr.bf16.mxu0 %v933
        %1154 = vmatpush1.bf16.msra.mxu0 %v932
        %1155 = vmatprep.subr.bf16.mxu0 %v935
        %1156 = vmatpush1.bf16.msra.mxu0 %v934
        %1157 = vmatprep.subr.bf16.mxu0 %v937
        %1158 = vmatpush1.bf16.msra.mxu0 %v936
        %1159 = vmatprep.subr.bf16.mxu0 %v939
        %1160 = vmatpush1.bf16.msra.mxu0 %v938
        %1161 = vmatprep.subr.bf16.mxu0 %v941
        %1162 = vmatpush1.bf16.msra.mxu0 %v940
        %1163 = vmatprep.subr.bf16.mxu0 %v943
        %1164 = vmatpush1.bf16.msra.mxu0 %v942
        %1165 = vmatprep.subr.bf16.mxu0 %v945
        %1166 = vmatpush1.bf16.msra.mxu0 %v944
        %1167 = vmatprep.mubr.bf16.mxu0 %v455
        %1168 = vmatmul.mubr.bf16.gmra.mrb[0].mxu0 %v454
        %v1169 = vpop.f32.mrb[0].mxu0
        %v1170 = vadd.f32 %v613, %v1169
        %v1171 = vpop.f32.mrb[0].mxu0
        %v1172 = vadd.f32 %v617, %v1171
        %v1173 = vpop.f32.mrb[0].mxu0
        %v1174 = vadd.f32 %v613, %v1173
        %v1175 = vpop.f32.mrb[0].mxu0
        %v1176 = vadd.f32 %v617, %v1175
        %1177 = vmatprep.mubr.bf16.mxu0 %v462
        %1178 = vmatmul.mubr.bf16.gmra.mrb[0].mxu0 %v461
        %v1179 = vpop.f32.mrb[0].mxu0
        %v1180 = vadd.f32 %v613, %v1179
        %v1181 = vpop.f32.mrb[0].mxu0
        %v1182 = vadd.f32 %v617, %v1181
        %v1183 = vpop.f32.mrb[0].mxu0
        %v1184 = vadd.f32 %v613, %v1183
        %v1185 = vpop.f32.mrb[0].mxu0
        %v1186 = vadd.f32 %v617, %v1185
        %1187 = vmatprep.mubr.bf16.mxu0 %v469
        %1188 = vmatmul.mubr.bf16.gmra.mrb[0].mxu0 %v468
        %v1189 = vpop.f32.mrb[0].mxu0
        %v1190 = vadd.f32 %v613, %v1189
        %v1191 = vpop.f32.mrb[0].mxu0
        %v1192 = vadd.f32 %v617, %v1191
        %v1193 = vpop.f32.mrb[0].mxu0
        %v1194 = vadd.f32 %v613, %v1193
        %v1195 = vpop.f32.mrb[0].mxu0
        %v1196 = vadd.f32 %v617, %v1195
        %1197 = vmatprep.mubr.bf16.mxu0 %v476
        %1198 = vmatmul.mubr.bf16.gmra.mrb[0].mxu0 %v475
        %v1199 = vpop.f32.mrb[0].mxu0
        %v1200 = vadd.f32 %v613, %v1199
        %v1201 = vpop.f32.mrb[0].mxu0
        %v1202 = vadd.f32 %v617, %v1201
        %v1203 = vpop.f32.mrb[0].mxu0
        %v1204 = vadd.f32 %v613, %v1203
        %v1205 = vpop.f32.mrb[0].mxu0
        %v1206 = vadd.f32 %v617, %v1205
        %1207 = vmatprep.mubr.bf16.mxu0 %v483
        %1208 = vmatmul.mubr.bf16.gmra.mrb[0].mxu0 %v482
        %v1209 = vpop.f32.mrb[0].mxu0
        %v1210 = vadd.f32 %v613, %v1209
        %v1211 = vpop.f32.mrb[0].mxu0
        %v1212 = vadd.f32 %v617, %v1211
        %v1213 = vpop.f32.mrb[0].mxu0
        %v1214 = vadd.f32 %v613, %v1213
        %v1215 = vpop.f32.mrb[0].mxu0
        %v1216 = vadd.f32 %v617, %v1215
        %1217 = vmatprep.mubr.bf16.mxu0 %v490
        %1218 = vmatmul.mubr.bf16.gmra.mrb[0].mxu0 %v489
        %v1219 = vpop.f32.mrb[0].mxu0
        %v1220 = vadd.f32 %v613, %v1219
        %v1221 = vpop.f32.mrb[0].mxu0
        %v1222 = vadd.f32 %v617, %v1221
        %v1223 = vpop.f32.mrb[0].mxu0
        %v1224 = vadd.f32 %v613, %v1223
        %v1225 = vpop.f32.mrb[0].mxu0
        %v1226 = vadd.f32 %v617, %v1225
        %1227 = vmatprep.mubr.bf16.mxu0 %v497
        %1228 = vmatmul.mubr.bf16.gmra.mrb[0].mxu0 %v496
        %v1229 = vpop.f32.mrb[0].mxu0
        %v1230 = vadd.f32 %v613, %v1229
        %v1231 = vpop.f32.mrb[0].mxu0
        %v1232 = vadd.f32 %v617, %v1231
        %v1233 = vpop.f32.mrb[0].mxu0
        %v1234 = vadd.f32 %v613, %v1233
        %v1235 = vpop.f32.mrb[0].mxu0
        %v1236 = vadd.f32 %v617, %v1235
        %1237 = vmatprep.mubr.bf16.mxu0 %v504
        %1238 = vmatmul.mubr.bf16.gmra.mrb[0].mxu0 %v503
        %v1239 = vpop.f32.mrb[0].mxu0
        %v1240 = vadd.f32 %v613, %v1239
        %v1241 = vpop.f32.mrb[0].mxu0
        %v1242 = vadd.f32 %v617, %v1241
        %v1243 = vpop.f32.mrb[0].mxu0
        %v1244 = vadd.f32 %v613, %v1243
        %v1245 = vpop.f32.mrb[0].mxu0
        %v1246 = vadd.f32 %v617, %v1245
        %1247 = vdwg.mxu0
        %1248 = vmatprep.subr.bf16.mxu0 %v947
        %1249 = vmatpush1.bf16.msra.mxu0 %v946
        %1250 = vmatprep.subr.bf16.mxu0 %v949
        %1251 = vmatpush1.bf16.msra.mxu0 %v948
        %1252 = vmatprep.subr.bf16.mxu0 %v951
        %1253 = vmatpush1.bf16.msra.mxu0 %v950
        %1254 = vmatprep.subr.bf16.mxu0 %v953
        %1255 = vmatpush1.bf16.msra.mxu0 %v952
        %1256 = vmatprep.subr.bf16.mxu0 %v955
        %1257 = vmatpush1.bf16.msra.mxu0 %v954
        %1258 = vmatprep.subr.bf16.mxu0 %v957
        %1259 = vmatpush1.bf16.msra.mxu0 %v956
        %1260 = vmatprep.subr.bf16.mxu0 %v959
        %1261 = vmatpush1.bf16.msra.mxu0 %v958
        %1262 = vmatprep.subr.bf16.mxu0 %v961
        %1263 = vmatpush1.bf16.msra.mxu0 %v960
        %1264 = vmatprep.subr.bf16.mxu0 %v963
        %1265 = vmatpush1.bf16.msra.mxu0 %v962
        %1266 = vmatprep.subr.bf16.mxu0 %v965
        %1267 = vmatpush1.bf16.msra.mxu0 %v964
        %1268 = vmatprep.subr.bf16.mxu0 %v967
        %1269 = vmatpush1.bf16.msra.mxu0 %v966
        %1270 = vmatprep.subr.bf16.mxu0 %v969
        %1271 = vmatpush1.bf16.msra.mxu0 %v968
        %1272 = vmatprep.subr.bf16.mxu0 %v971
        %1273 = vmatpush1.bf16.msra.mxu0 %v970
        %1274 = vmatprep.subr.bf16.mxu0 %v973
        %1275 = vmatpush1.bf16.msra.mxu0 %v972
        %1276 = vmatprep.subr.bf16.mxu0 %v975
        %1277 = vmatpush1.bf16.msra.mxu0 %v974
        %1278 = vmatprep.subr.bf16.mxu0 %v977
        %1279 = vmatpush1.bf16.msra.mxu0 %v976
        %1280 = vmatprep.mubr.bf16.mxu0 %v457
        %1281 = vmatmul.mubr.bf16.gmra.mrb[0].mxu0 %v456
        %v1282 = vpop.f32.mrb[0].mxu0
        %v1283 = vadd.f32 %v1170, %v1282
        %v1284 = vpop.f32.mrb[0].mxu0
        %v1285 = vadd.f32 %v1172, %v1284
        %v1286 = vpop.f32.mrb[0].mxu0
        %v1287 = vadd.f32 %v1174, %v1286
        %v1288 = vpop.f32.mrb[0].mxu0
        %v1289 = vadd.f32 %v1176, %v1288
        %1290 = vmatprep.mubr.bf16.mxu0 %v464
        %1291 = vmatmul.mubr.bf16.gmra.mrb[0].mxu0 %v463
        %v1292 = vpop.f32.mrb[0].mxu0
        %v1293 = vadd.f32 %v1180, %v1292
        %v1294 = vpop.f32.mrb[0].mxu0
        %v1295 = vadd.f32 %v1182, %v1294
        %v1296 = vpop.f32.mrb[0].mxu0
        %v1297 = vadd.f32 %v1184, %v1296
        %v1298 = vpop.f32.mrb[0].mxu0
        %v1299 = vadd.f32 %v1186, %v1298
        %1300 = vmatprep.mubr.bf16.mxu0 %v471
        %1301 = vmatmul.mubr.bf16.gmra.mrb[0].mxu0 %v470
        %v1302 = vpop.f32.mrb[0].mxu0
        %v1303 = vadd.f32 %v1190, %v1302
        %v1304 = vpop.f32.mrb[0].mxu0
        %v1305 = vadd.f32 %v1192, %v1304
        %v1306 = vpop.f32.mrb[0].mxu0
        %v1307 = vadd.f32 %v1194, %v1306
        %v1308 = vpop.f32.mrb[0].mxu0
        %v1309 = vadd.f32 %v1196, %v1308
        %1310 = vmatprep.mubr.bf16.mxu0 %v478
        %1311 = vmatmul.mubr.bf16.gmra.mrb[0].mxu0 %v477
        %v1312 = vpop.f32.mrb[0].mxu0
        %v1313 = vadd.f32 %v1200, %v1312
        %v1314 = vpop.f32.mrb[0].mxu0
        %v1315 = vadd.f32 %v1202, %v1314
        %v1316 = vpop.f32.mrb[0].mxu0
        %v1317 = vadd.f32 %v1204, %v1316
        %v1318 = vpop.f32.mrb[0].mxu0
        %v1319 = vadd.f32 %v1206, %v1318
        %1320 = vmatprep.mubr.bf16.mxu0 %v485
        %1321 = vmatmul.mubr.bf16.gmra.mrb[0].mxu0 %v484
        %v1322 = vpop.f32.mrb[0].mxu0
        %v1323 = vadd.f32 %v1210, %v1322
        %v1324 = vpop.f32.mrb[0].mxu0
        %v1325 = vadd.f32 %v1212, %v1324
        %v1326 = vpop.f32.mrb[0].mxu0
        %v1327 = vadd.f32 %v1214, %v1326
        %v1328 = vpop.f32.mrb[0].mxu0
        %v1329 = vadd.f32 %v1216, %v1328
        %1330 = vmatprep.mubr.bf16.mxu0 %v492
        %1331 = vmatmul.mubr.bf16.gmra.mrb[0].mxu0 %v491
        %v1332 = vpop.f32.mrb[0].mxu0
        %v1333 = vadd.f32 %v1220, %v1332
        %v1334 = vpop.f32.mrb[0].mxu0
        %v1335 = vadd.f32 %v1222, %v1334
        %v1336 = vpop.f32.mrb[0].mxu0
        %v1337 = vadd.f32 %v1224, %v1336
        %v1338 = vpop.f32.mrb[0].mxu0
        %v1339 = vadd.f32 %v1226, %v1338
        %1340 = vmatprep.mubr.bf16.mxu0 %v499
        %1341 = vmatmul.mubr.bf16.gmra.mrb[0].mxu0 %v498
        %v1342 = vpop.f32.mrb[0].mxu0
        %v1343 = vadd.f32 %v1230, %v1342
        %v1344 = vpop.f32.mrb[0].mxu0
        %v1345 = vadd.f32 %v1232, %v1344
        %v1346 = vpop.f32.mrb[0].mxu0
        %v1347 = vadd.f32 %v1234, %v1346
        %v1348 = vpop.f32.mrb[0].mxu0
        %v1349 = vadd.f32 %v1236, %v1348
        %1350 = vmatprep.mubr.bf16.mxu0 %v506
        %1351 = vmatmul.mubr.bf16.gmra.mrb[0].mxu0 %v505
        %v1352 = vpop.f32.mrb[0].mxu0
        %v1353 = vadd.f32 %v1240, %v1352
        %v1354 = vpop.f32.mrb[0].mxu0
        %v1355 = vadd.f32 %v1242, %v1354
        %v1356 = vpop.f32.mrb[0].mxu0
        %v1357 = vadd.f32 %v1244, %v1356
        %v1358 = vpop.f32.mrb[0].mxu0
        %v1359 = vadd.f32 %v1246, %v1358
        %1360 = vdwg.mxu0
        %1361 = vmatprep.subr.bf16.mxu0 %v979
        %1362 = vmatpush1.bf16.msra.mxu0 %v978
        %1363 = vmatprep.subr.bf16.mxu0 %v981
        %1364 = vmatpush1.bf16.msra.mxu0 %v980
        %1365 = vmatprep.subr.bf16.mxu0 %v983
        %1366 = vmatpush1.bf16.msra.mxu0 %v982
        %1367 = vmatprep.subr.bf16.mxu0 %v985
        %1368 = vmatpush1.bf16.msra.mxu0 %v984
        %1369 = vmatprep.subr.bf16.mxu0 %v987
        %1370 = vmatpush1.bf16.msra.mxu0 %v986
        %1371 = vmatprep.subr.bf16.mxu0 %v989
        %1372 = vmatpush1.bf16.msra.mxu0 %v988
        %1373 = vmatprep.subr.bf16.mxu0 %v991
        %1374 = vmatpush1.bf16.msra.mxu0 %v990
        %1375 = vmatprep.subr.bf16.mxu0 %v993
        %1376 = vmatpush1.bf16.msra.mxu0 %v992
        %1377 = vmatprep.subr.bf16.mxu0 %v995
        %1378 = vmatpush1.bf16.msra.mxu0 %v994
        %1379 = vmatprep.subr.bf16.mxu0 %v997
        %1380 = vmatpush1.bf16.msra.mxu0 %v996
        %1381 = vmatprep.subr.bf16.mxu0 %v999
        %1382 = vmatpush1.bf16.msra.mxu0 %v998
        %1383 = vmatprep.subr.bf16.mxu0 %v1001
        %1384 = vmatpush1.bf16.msra.mxu0 %v1000
        %1385 = vmatprep.subr.bf16.mxu0 %v1003
        %1386 = vmatpush1.bf16.msra.mxu0 %v1002
        %1387 = vmatprep.subr.bf16.mxu0 %v1005
        %1388 = vmatpush1.bf16.msra.mxu0 %v1004
        %1389 = vmatprep.subr.bf16.mxu0 %v1007
        %1390 = vmatpush1.bf16.msra.mxu0 %v1006
        %1391 = vmatprep.subr.bf16.mxu0 %v1009
        %1392 = vmatpush1.bf16.msra.mxu0 %v1008
        %1393 = vmatprep.mubr.bf16.mxu0 %v459
        %1394 = vmatmul.mubr.bf16.gmra.mrb[0].mxu0 %v458
        %v1395 = vpop.f32.mrb[0].mxu0
        %v1396 = vadd.f32 %v1283, %v1395
        %v1397 = vpop.f32.mrb[0].mxu0
        %v1398 = vadd.f32 %v1285, %v1397
        %v1399 = vpop.f32.mrb[0].mxu0
        %v1400 = vadd.f32 %v1287, %v1399
        %v1401 = vpop.f32.mrb[0].mxu0
        %v1402 = vadd.f32 %v1289, %v1401
        %1403 = vmatprep.mubr.bf16.mxu0 %v466
        %1404 = vmatmul.mubr.bf16.gmra.mrb[0].mxu0 %v465
        %v1405 = vpop.f32.mrb[0].mxu0
        %v1406 = vadd.f32 %v1293, %v1405
        %v1407 = vpop.f32.mrb[0].mxu0
        %v1408 = vadd.f32 %v1295, %v1407
        %v1409 = vpop.f32.mrb[0].mxu0
        %v1410 = vadd.f32 %v1297, %v1409
        %v1411 = vpop.f32.mrb[0].mxu0
        %v1412 = vadd.f32 %v1299, %v1411
        %1413 = vmatprep.mubr.bf16.mxu0 %v473
        %1414 = vmatmul.mubr.bf16.gmra.mrb[0].mxu0 %v472
        %v1415 = vpop.f32.mrb[0].mxu0
        %v1416 = vadd.f32 %v1303, %v1415
        %v1417 = vpop.f32.mrb[0].mxu0
        %v1418 = vadd.f32 %v1305, %v1417
        %v1419 = vpop.f32.mrb[0].mxu0
        %v1420 = vadd.f32 %v1307, %v1419
        %v1421 = vpop.f32.mrb[0].mxu0
        %v1422 = vadd.f32 %v1309, %v1421
        %1423 = vmatprep.mubr.bf16.mxu0 %v480
        %1424 = vmatmul.mubr.bf16.gmra.mrb[0].mxu0 %v479
        %v1425 = vpop.f32.mrb[0].mxu0
        %v1426 = vadd.f32 %v1313, %v1425
        %v1427 = vpop.f32.mrb[0].mxu0
        %v1428 = vadd.f32 %v1315, %v1427
        %v1429 = vpop.f32.mrb[0].mxu0
        %v1430 = vadd.f32 %v1317, %v1429
        %v1431 = vpop.f32.mrb[0].mxu0
        %v1432 = vadd.f32 %v1319, %v1431
        %1433 = vmatprep.mubr.bf16.mxu0 %v487
        %1434 = vmatmul.mubr.bf16.gmra.mrb[0].mxu0 %v486
        %v1435 = vpop.f32.mrb[0].mxu0
        %v1436 = vadd.f32 %v1323, %v1435
        %v1437 = vpop.f32.mrb[0].mxu0
        %v1438 = vadd.f32 %v1325, %v1437
        %v1439 = vpop.f32.mrb[0].mxu0
        %v1440 = vadd.f32 %v1327, %v1439
        %v1441 = vpop.f32.mrb[0].mxu0
        %v1442 = vadd.f32 %v1329, %v1441
        %1443 = vmatprep.mubr.bf16.mxu0 %v494
        %1444 = vmatmul.mubr.bf16.gmra.mrb[0].mxu0 %v493
        %v1445 = vpop.f32.mrb[0].mxu0
        %v1446 = vadd.f32 %v1333, %v1445
        %v1447 = vpop.f32.mrb[0].mxu0
        %v1448 = vadd.f32 %v1335, %v1447
        %v1449 = vpop.f32.mrb[0].mxu0
        %v1450 = vadd.f32 %v1337, %v1449
        %v1451 = vpop.f32.mrb[0].mxu0
        %v1452 = vadd.f32 %v1339, %v1451
        %1453 = vmatprep.mubr.bf16.mxu0 %v501
        %1454 = vmatmul.mubr.bf16.gmra.mrb[0].mxu0 %v500
        %v1455 = vpop.f32.mrb[0].mxu0
        %v1456 = vadd.f32 %v1343, %v1455
        %v1457 = vpop.f32.mrb[0].mxu0
        %v1458 = vadd.f32 %v1345, %v1457
        %v1459 = vpop.f32.mrb[0].mxu0
        %v1460 = vadd.f32 %v1347, %v1459
        %v1461 = vpop.f32.mrb[0].mxu0
        %v1462 = vadd.f32 %v1349, %v1461
        %1463 = vmatprep.mubr.bf16.mxu0 %v508
        %1464 = vmatmul.mubr.bf16.gmra.mrb[0].mxu0 %v507
        %v1465 = vpop.f32.mrb[0].mxu0
        %v1466 = vadd.f32 %v1353, %v1465
        %v1467 = vpop.f32.mrb[0].mxu0
        %v1468 = vadd.f32 %v1355, %v1467
        %v1469 = vpop.f32.mrb[0].mxu0
        %v1470 = vadd.f32 %v1357, %v1469
        %v1471 = vpop.f32.mrb[0].mxu0
        %v1472 = vadd.f32 %v1359, %v1471
        %1473 = vdwg.mxu0
        %1474 = vmatprep.subr.bf16.mxu0 %v1011
        %1475 = vmatpush1.bf16.msra.mxu0 %v1010
        %1476 = vmatprep.subr.bf16.mxu0 0
        %1477 = vmatpush1.bf16.msra.mxu0 0
        %1478 = vmatprep.subr.bf16.mxu0 0
        %1479 = vmatpush1.bf16.msra.mxu0 0
        %1480 = vmatprep.subr.bf16.mxu0 0
        %1481 = vmatpush1.bf16.msra.mxu0 0
        %1482 = vmatprep.subr.bf16.mxu0 0
        %1483 = vmatpush1.bf16.msra.mxu0 0
        %1484 = vmatprep.subr.bf16.mxu0 0
        %1485 = vmatpush1.bf16.msra.mxu0 0
        %1486 = vmatprep.subr.bf16.mxu0 0
        %1487 = vmatpush1.bf16.msra.mxu0 0
        %1488 = vmatprep.subr.bf16.mxu0 0
        %1489 = vmatpush1.bf16.msra.mxu0 0
        %1490 = vmatprep.subr.bf16.mxu0 0
        %1491 = vmatpush1.bf16.msra.mxu0 0
        %1492 = vmatprep.subr.bf16.mxu0 0
        %1493 = vmatpush1.bf16.msra.mxu0 0
        %1494 = vmatprep.subr.bf16.mxu0 0
        %1495 = vmatpush1.bf16.msra.mxu0 0
        %1496 = vmatprep.subr.bf16.mxu0 0
        %1497 = vmatpush1.bf16.msra.mxu0 0
        %1498 = vmatprep.subr.bf16.mxu0 0
        %1499 = vmatpush1.bf16.msra.mxu0 0
        %1500 = vmatprep.subr.bf16.mxu0 0
        %1501 = vmatpush1.bf16.msra.mxu0 0
        %1502 = vmatprep.subr.bf16.mxu0 0
        %1503 = vmatpush1.bf16.msra.mxu0 0
        %1504 = vmatprep.subr.bf16.mxu0 0
        %1505 = vmatpush1.bf16.msra.mxu0 0
        %1506 = vmatprep.mubr.bf16.mxu0 0
        %1507 = vmatmul.mubr.bf16.gmra.mrb[0].mxu0 %v1112
        %v1508 = vpop.f32.mrb[0].mxu0
        %v1509 = vadd.f32 %v1396, %v1508
        %v1510 = vpop.f32.mrb[0].mxu0
        %v1511 = vadd.f32 %v1398, %v1510
        %v1512 = vpop.f32.mrb[0].mxu0
        %v1513 = vadd.f32 %v1400, %v1512
        %v1514 = vpop.f32.mrb[0].mxu0
        %v1515 = vadd.f32 %v1402, %v1514
        %1516 = vmatprep.mubr.bf16.mxu0 0
        %1517 = vmatmul.mubr.bf16.gmra.mrb[0].mxu0 %v1115
        %v1518 = vpop.f32.mrb[0].mxu0
        %v1519 = vadd.f32 %v1406, %v1518
        %v1520 = vpop.f32.mrb[0].mxu0
        %v1521 = vadd.f32 %v1408, %v1520
        %v1522 = vpop.f32.mrb[0].mxu0
        %v1523 = vadd.f32 %v1410, %v1522
        %v1524 = vpop.f32.mrb[0].mxu0
        %v1525 = vadd.f32 %v1412, %v1524
        %1526 = vmatprep.mubr.bf16.mxu0 0
        %1527 = vmatmul.mubr.bf16.gmra.mrb[0].mxu0 %v1118
        %v1528 = vpop.f32.mrb[0].mxu0
        %v1529 = vadd.f32 %v1416, %v1528
        %v1530 = vpop.f32.mrb[0].mxu0
        %v1531 = vadd.f32 %v1418, %v1530
        %v1532 = vpop.f32.mrb[0].mxu0
        %v1533 = vadd.f32 %v1420, %v1532
        %v1534 = vpop.f32.mrb[0].mxu0
        %v1535 = vadd.f32 %v1422, %v1534
        %1536 = vmatprep.mubr.bf16.mxu0 0
        %1537 = vmatmul.mubr.bf16.gmra.mrb[0].mxu0 %v1121
        %v1538 = vpop.f32.mrb[0].mxu0
        %v1539 = vadd.f32 %v1426, %v1538
        %v1540 = vpop.f32.mrb[0].mxu0
        %v1541 = vadd.f32 %v1428, %v1540
        %v1542 = vpop.f32.mrb[0].mxu0
        %v1543 = vadd.f32 %v1430, %v1542
        %v1544 = vpop.f32.mrb[0].mxu0
        %v1545 = vadd.f32 %v1432, %v1544
        %1546 = vmatprep.mubr.bf16.mxu0 0
        %1547 = vmatmul.mubr.bf16.gmra.mrb[0].mxu0 %v1124
        %v1548 = vpop.f32.mrb[0].mxu0
        %v1549 = vadd.f32 %v1436, %v1548
        %v1550 = vpop.f32.mrb[0].mxu0
        %v1551 = vadd.f32 %v1438, %v1550
        %v1552 = vpop.f32.mrb[0].mxu0
        %v1553 = vadd.f32 %v1440, %v1552
        %v1554 = vpop.f32.mrb[0].mxu0
        %v1555 = vadd.f32 %v1442, %v1554
        %1556 = vmatprep.mubr.bf16.mxu0 0
        %1557 = vmatmul.mubr.bf16.gmra.mrb[0].mxu0 %v1127
        %v1558 = vpop.f32.mrb[0].mxu0
        %v1559 = vadd.f32 %v1446, %v1558
        %v1560 = vpop.f32.mrb[0].mxu0
        %v1561 = vadd.f32 %v1448, %v1560
        %v1562 = vpop.f32.mrb[0].mxu0
        %v1563 = vadd.f32 %v1450, %v1562
        %v1564 = vpop.f32.mrb[0].mxu0
        %v1565 = vadd.f32 %v1452, %v1564
        %1566 = vmatprep.mubr.bf16.mxu0 0
        %1567 = vmatmul.mubr.bf16.gmra.mrb[0].mxu0 %v1130
        %v1568 = vpop.f32.mrb[0].mxu0
        %v1569 = vadd.f32 %v1456, %v1568
        %v1570 = vpop.f32.mrb[0].mxu0
        %v1571 = vadd.f32 %v1458, %v1570
        %v1572 = vpop.f32.mrb[0].mxu0
        %v1573 = vadd.f32 %v1460, %v1572
        %v1574 = vpop.f32.mrb[0].mxu0
        %v1575 = vadd.f32 %v1462, %v1574
        %1576 = vmatprep.mubr.bf16.mxu0 0
        %1577 = vmatmul.mubr.bf16.gmra.mrb[0].mxu0 %v1133
        %v1578 = vpop.f32.mrb[0].mxu0
        %v1579 = vadd.f32 %v1466, %v1578
        %v1580 = vpop.f32.mrb[0].mxu0
        %v1581 = vadd.f32 %v1468, %v1580
        %v1582 = vpop.f32.mrb[0].mxu0
        %v1583 = vadd.f32 %v1470, %v1582
        %v1584 = vpop.f32.mrb[0].mxu0
        %v1585 = vadd.f32 %v1472, %v1584
        %1586 = vdwg.mxu0
        %v1587 = vmul.f32 %v1509, 0.2
        %v1588 = vmul.f32 %v1511, 0.2
        %v1589 = vmul.f32 %v1513, 0.2
        %v1590 = vmul.f32 %v1515, 0.2
        %v1591 = vmul.f32 %v1519, 0.2
        %v1592 = vmul.f32 %v1521, 0.2
        %v1593 = vmul.f32 %v1523, 0.2
        %v1594 = vmul.f32 %v1525, 0.2
        %v1595 = vmul.f32 %v1529, 0.2
        %v1596 = vmul.f32 %v1531, 0.2
        %v1597 = vmul.f32 %v1533, 0.2
        %v1598 = vmul.f32 %v1535, 0.2
        %v1599 = vmul.f32 %v1539, 0.2
        %v1600 = vmul.f32 %v1541, 0.2
        %v1601 = vmul.f32 %v1543, 0.2
        %v1602 = vmul.f32 %v1545, 0.2
        %v1603 = vmul.f32 %v1549, 0.2
        %v1604 = vmul.f32 %v1551, 0.2
        %v1605 = vmul.f32 %v1553, 0.2
        %v1606 = vmul.f32 %v1555, 0.2
        %v1607 = vmul.f32 %v1559, 0.2
        %v1608 = vmul.f32 %v1561, 0.2
        %v1609 = vmul.f32 %v1563, 0.2
        %v1610 = vmul.f32 %v1565, 0.2
        %v1611 = vmul.f32 %v1569, 0.2
        %v1612 = vmul.f32 %v1571, 0.2
        %v1613 = vmul.f32 %v1573, 0.2
        %v1614 = vmul.f32 %v1575, 0.2
        %v1615 = vmul.f32 %v1579, 0.2
        %v1616 = vmul.f32 %v1581, 0.2
        %v1617 = vmul.f32 %v1583, 0.2
        %v1618 = vmul.f32 %v1585, 0.2
        %v1619 = vmax.f32 %v1509, %v1587
        %v1620 = vmax.f32 %v1511, %v1588
        %v1621 = vmax.f32 %v1513, %v1589
        %v1622 = vmax.f32 %v1515, %v1590
        %v1623 = vmax.f32 %v1519, %v1591
        %v1624 = vmax.f32 %v1521, %v1592
        %v1625 = vmax.f32 %v1523, %v1593
        %v1626 = vmax.f32 %v1525, %v1594
        %v1627 = vmax.f32 %v1529, %v1595
        %v1628 = vmax.f32 %v1531, %v1596
        %v1629 = vmax.f32 %v1533, %v1597
        %v1630 = vmax.f32 %v1535, %v1598
        %v1631 = vmax.f32 %v1539, %v1599
        %v1632 = vmax.f32 %v1541, %v1600
        %v1633 = vmax.f32 %v1543, %v1601
        %v1634 = vmax.f32 %v1545, %v1602
        %v1635 = vmax.f32 %v1549, %v1603
        %v1636 = vmax.f32 %v1551, %v1604
        %v1637 = vmax.f32 %v1553, %v1605
        %v1638 = vmax.f32 %v1555, %v1606
        %v1639 = vmax.f32 %v1559, %v1607
        %v1640 = vmax.f32 %v1561, %v1608
        %v1641 = vmax.f32 %v1563, %v1609
        %v1642 = vmax.f32 %v1565, %v1610
        %v1643 = vmax.f32 %v1569, %v1611
        %v1644 = vmax.f32 %v1571, %v1612
        %v1645 = vmax.f32 %v1573, %v1613
        %v1646 = vmax.f32 %v1575, %v1614
        %v1647 = vmax.f32 %v1579, %v1615
        %v1648 = vmax.f32 %v1581, %v1616
        %v1649 = vmax.f32 %v1583, %v1617
        %v1650 = vmax.f32 %v1585, %v1618
        %v1651 = vpack.c.bf16 %v1621, %v1619
        %v1652 = vpack.c.bf16 %v1622, %v1620
        %v1653 = vpack.c.bf16 %v1625, %v1623
        %v1654 = vpack.c.bf16 %v1626, %v1624
        %v1655 = vpack.c.bf16 %v1629, %v1627
        %v1656 = vpack.c.bf16 %v1630, %v1628
        %v1657 = vpack.c.bf16 %v1633, %v1631
        %v1658 = vpack.c.bf16 %v1634, %v1632
        %v1659 = vpack.c.bf16 %v1637, %v1635
        %v1660 = vpack.c.bf16 %v1638, %v1636
        %v1661 = vpack.c.bf16 %v1641, %v1639
        %v1662 = vpack.c.bf16 %v1642, %v1640
        %v1663 = vpack.c.bf16 %v1645, %v1643
        %v1664 = vpack.c.bf16 %v1646, %v1644
        %v1665 = vpack.c.bf16 %v1649, %v1647
        %v1666 = vpack.c.bf16 %v1650, %v1648
        %v1667 = vld [vmem:[#allocation8] sm:$0xff]
        %v1668 = vld [vmem:[#allocation8 + $0x8] sm:$0xff]
        %v1669 = vld [vmem:[#allocation8 + $0x10] sm:$0xff]
        %v1670 = vld [vmem:[#allocation8 + $0x18] sm:$0xff]
        %v1671 = vld [vmem:[#allocation8 + $0x20] sm:$0xff]
        %v1672 = vld [vmem:[#allocation8 + $0x28] sm:$0xff]
        %v1673 = vld [vmem:[#allocation8 + $0x30] sm:$0xff]
        %v1674 = vld [vmem:[#allocation8 + $0x38] sm:$0xff]
        %v1675 = vld [vmem:[#allocation8 + $0x40] sm:$0xff]
        %v1676 = vld [vmem:[#allocation8 + $0x48] sm:$0xff]
        %v1677 = vld [vmem:[#allocation8 + $0x50] sm:$0xff]
        %v1678 = vld [vmem:[#allocation8 + $0x58] sm:$0xff]
        %v1679 = vld [vmem:[#allocation8 + $0x60] sm:$0xff]
        %v1680 = vld [vmem:[#allocation8 + $0x68] sm:$0xff]
        %v1681 = vld [vmem:[#allocation8 + $0x70] sm:$0xff]
        %v1682 = vld [vmem:[#allocation8 + $0x78] sm:$0xff]
        %v1683 = vld [vmem:[#allocation8 + $0x80] sm:$0xff]
        %v1684 = vld [vmem:[#allocation8 + $0x88] sm:$0xff]
        %v1685 = vld [vmem:[#allocation8 + $0x90] sm:$0xff]
        %v1686 = vld [vmem:[#allocation8 + $0x98] sm:$0xff]
        %v1687 = vld [vmem:[#allocation8 + $0xa0] sm:$0xff]
        %v1688 = vld [vmem:[#allocation8 + $0xa8] sm:$0xff]
        %v1689 = vld [vmem:[#allocation8 + $0xb0] sm:$0xff]
        %v1690 = vld [vmem:[#allocation8 + $0xb8] sm:$0xff]
        %v1691 = vld [vmem:[#allocation8 + $0xc0] sm:$0xff]
        %v1692 = vld [vmem:[#allocation8 + $0xc8] sm:$0xff]
        %v1693 = vld [vmem:[#allocation8 + $0xd0] sm:$0xff]
        %v1694 = vld [vmem:[#allocation8 + $0xd8] sm:$0xff]
        %v1695 = vld [vmem:[#allocation8 + $0xe0] sm:$0xff]
        %v1696 = vld [vmem:[#allocation8 + $0xe8] sm:$0xff]
        %v1697 = vld [vmem:[#allocation8 + $0xf0] sm:$0xff]
        %v1698 = vld [vmem:[#allocation8 + $0xf8] sm:$0xff]
        %v1699 = vld [vmem:[%s4] sm:$0x3]
        %v1701 = vlaneseq
        %v1702 = vshrl.u32 %v1701, 7
        %v1703 = vsub.s32 0, %v1702
        %v1704 = vrot.slane %v1699, %v1703
        %v1705 = vlaneseq
        %v1706 = vshrl.u32 %v1705, 7
        %v1707 = vsub.s32 1, %v1706
        %v1708 = vrot.slane %v1699, %v1707
        %v1743 = vunpack.c.l.b16 %v1667
        %v1744 = vunpack.c.h.b16 %v1667
        %v1745 = vunpack.c.l.b16 %v1668
        %v1746 = vunpack.c.h.b16 %v1668
        %v1747 = vunpack.c.l.b16 %v1669
        %v1748 = vunpack.c.h.b16 %v1669
        %v1749 = vunpack.c.l.b16 %v1670
        %v1750 = vunpack.c.h.b16 %v1670
        %v1751 = vunpack.c.l.b16 %v1671
        %v1752 = vunpack.c.h.b16 %v1671
        %v1753 = vunpack.c.l.b16 %v1672
        %v1754 = vunpack.c.h.b16 %v1672
        %v1755 = vunpack.c.l.b16 %v1673
        %v1756 = vunpack.c.h.b16 %v1673
        %v1757 = vunpack.c.l.b16 %v1674
        %v1758 = vunpack.c.h.b16 %v1674
        %v1759 = vunpack.c.l.b16 %v1675
        %v1760 = vunpack.c.h.b16 %v1675
        %v1761 = vunpack.c.l.b16 %v1676
        %v1762 = vunpack.c.h.b16 %v1676
        %v1763 = vunpack.c.l.b16 %v1677
        %v1764 = vunpack.c.h.b16 %v1677
        %v1765 = vunpack.c.l.b16 %v1678
        %v1766 = vunpack.c.h.b16 %v1678
        %v1767 = vunpack.c.l.b16 %v1679
        %v1768 = vunpack.c.h.b16 %v1679
        %v1769 = vunpack.c.l.b16 %v1680
        %v1770 = vunpack.c.h.b16 %v1680
        %v1771 = vunpack.c.l.b16 %v1681
        %v1772 = vunpack.c.h.b16 %v1681
        %v1773 = vunpack.c.l.b16 %v1682
        %v1774 = vunpack.c.h.b16 %v1682
        %v1775 = vunpack.c.l.b16 %v1683
        %v1776 = vunpack.c.h.b16 %v1683
        %v1777 = vunpack.c.l.b16 %v1684
        %v1778 = vunpack.c.h.b16 %v1684
        %v1779 = vunpack.c.l.b16 %v1685
        %v1780 = vunpack.c.h.b16 %v1685
        %v1781 = vunpack.c.l.b16 %v1686
        %v1782 = vunpack.c.h.b16 %v1686
        %v1783 = vunpack.c.l.b16 %v1687
        %v1784 = vunpack.c.h.b16 %v1687
        %v1785 = vunpack.c.l.b16 %v1688
        %v1786 = vunpack.c.h.b16 %v1688
        %v1787 = vunpack.c.l.b16 %v1689
        %v1788 = vunpack.c.h.b16 %v1689
        %v1789 = vunpack.c.l.b16 %v1690
        %v1790 = vunpack.c.h.b16 %v1690
        %v1791 = vunpack.c.l.b16 %v1691
        %v1792 = vunpack.c.h.b16 %v1691
        %v1793 = vunpack.c.l.b16 %v1692
        %v1794 = vunpack.c.h.b16 %v1692
        %v1795 = vunpack.c.l.b16 %v1693
        %v1796 = vunpack.c.h.b16 %v1693
        %v1797 = vunpack.c.l.b16 %v1694
        %v1798 = vunpack.c.h.b16 %v1694
        %v1799 = vunpack.c.l.b16 %v1695
        %v1800 = vunpack.c.h.b16 %v1695
        %v1801 = vunpack.c.l.b16 %v1696
        %v1802 = vunpack.c.h.b16 %v1696
        %v1803 = vunpack.c.l.b16 %v1697
        %v1804 = vunpack.c.h.b16 %v1697
        %v1805 = vunpack.c.l.b16 %v1698
        %v1806 = vunpack.c.h.b16 %v1698
        %v1807 = vpack.c.b16 %v1745, %v1743
        %v1808 = vpack.c.b16 %v1746, %v1744
        %v1809 = vpack.c.b16 %v1749, %v1747
        %v1810 = vpack.c.b16 %v1750, %v1748
        %v1811 = vpack.c.b16 %v1753, %v1751
        %v1812 = vpack.c.b16 %v1754, %v1752
        %v1813 = vpack.c.b16 %v1757, %v1755
        %v1814 = vpack.c.b16 %v1758, %v1756
        %v1815 = vpack.c.b16 %v1761, %v1759
        %v1816 = vpack.c.b16 %v1762, %v1760
        %v1817 = vpack.c.b16 %v1765, %v1763
        %v1818 = vpack.c.b16 %v1766, %v1764
        %v1819 = vpack.c.b16 %v1769, %v1767
        %v1820 = vpack.c.b16 %v1770, %v1768
        %v1821 = vpack.c.b16 %v1773, %v1771
        %v1822 = vpack.c.b16 %v1774, %v1772
        %v1823 = vpack.c.b16 %v1777, %v1775
        %v1824 = vpack.c.b16 %v1778, %v1776
        %v1825 = vpack.c.b16 %v1781, %v1779
        %v1826 = vpack.c.b16 %v1782, %v1780
        %v1827 = vpack.c.b16 %v1785, %v1783
        %v1828 = vpack.c.b16 %v1786, %v1784
        %v1829 = vpack.c.b16 %v1789, %v1787
        %v1830 = vpack.c.b16 %v1790, %v1788
        %v1831 = vpack.c.b16 %v1793, %v1791
        %v1832 = vpack.c.b16 %v1794, %v1792
        %v1833 = vpack.c.b16 %v1797, %v1795
        %v1834 = vpack.c.b16 %v1798, %v1796
        %v1835 = vpack.c.b16 %v1801, %v1799
        %v1836 = vpack.c.b16 %v1802, %v1800
        %v1837 = vpack.c.b16 %v1805, %v1803
        %v1838 = vpack.c.b16 %v1806, %v1804
        %1871 = vmatprep.subr.bf16.mxu0 %v1808
        %1872 = vmatpush1.bf16.msra.mxu0 %v1807
        %1873 = vmatprep.subr.bf16.mxu0 %v1810
        %1874 = vmatpush1.bf16.msra.mxu0 %v1809
        %1875 = vmatprep.subr.bf16.mxu0 %v1812
        %1876 = vmatpush1.bf16.msra.mxu0 %v1811
        %1877 = vmatprep.subr.bf16.mxu0 %v1814
        %1878 = vmatpush1.bf16.msra.mxu0 %v1813
        %1879 = vmatprep.subr.bf16.mxu0 %v1816
        %1880 = vmatpush1.bf16.msra.mxu0 %v1815
        %1881 = vmatprep.subr.bf16.mxu0 %v1818
        %1882 = vmatpush1.bf16.msra.mxu0 %v1817
        %1883 = vmatprep.subr.bf16.mxu0 %v1820
        %1884 = vmatpush1.bf16.msra.mxu0 %v1819
        %1885 = vmatprep.subr.bf16.mxu0 %v1822
        %1886 = vmatpush1.bf16.msra.mxu0 %v1821
        %1887 = vmatprep.subr.bf16.mxu0 %v1824
        %1888 = vmatpush1.bf16.msra.mxu0 %v1823
        %1889 = vmatprep.subr.bf16.mxu0 %v1826
        %1890 = vmatpush1.bf16.msra.mxu0 %v1825
        %1891 = vmatprep.subr.bf16.mxu0 %v1828
        %1892 = vmatpush1.bf16.msra.mxu0 %v1827
        %1893 = vmatprep.subr.bf16.mxu0 %v1830
        %1894 = vmatpush1.bf16.msra.mxu0 %v1829
        %1895 = vmatprep.subr.bf16.mxu0 %v1832
        %1896 = vmatpush1.bf16.msra.mxu0 %v1831
        %1897 = vmatprep.subr.bf16.mxu0 %v1834
        %1898 = vmatpush1.bf16.msra.mxu0 %v1833
        %1899 = vmatprep.subr.bf16.mxu0 %v1836
        %1900 = vmatpush1.bf16.msra.mxu0 %v1835
        %1901 = vmatprep.subr.bf16.mxu0 %v1838
        %1902 = vmatpush1.bf16.msra.mxu0 %v1837
        %1903 = vmatprep.mubr.bf16.mxu0 %v1652
        %1904 = vmatmul.mubr.bf16.gmra.mrb[0].mxu0 %v1651
        %v1905 = vpop.f32.mrb[0].mxu0
        %v1906 = vadd.f32 %v1704, %v1905
        %v1907 = vpop.f32.mrb[0].mxu0
        %v1908 = vadd.f32 %v1708, %v1907
        %v1909 = vpop.f32.mrb[0].mxu0
        %v1910 = vadd.f32 %v1704, %v1909
        %v1911 = vpop.f32.mrb[0].mxu0
        %v1912 = vadd.f32 %v1708, %v1911
        %1913 = vmatprep.mubr.bf16.mxu0 %v1654
        %1914 = vmatmul.mubr.bf16.gmra.mrb[0].mxu0 %v1653
        %v1915 = vpop.f32.mrb[0].mxu0
        %v1916 = vadd.f32 %v1704, %v1915
        %v1917 = vpop.f32.mrb[0].mxu0
        %v1918 = vadd.f32 %v1708, %v1917
        %v1919 = vpop.f32.mrb[0].mxu0
        %v1920 = vadd.f32 %v1704, %v1919
        %v1921 = vpop.f32.mrb[0].mxu0
        %v1922 = vadd.f32 %v1708, %v1921
        %1923 = vmatprep.mubr.bf16.mxu0 %v1656
        %1924 = vmatmul.mubr.bf16.gmra.mrb[0].mxu0 %v1655
        %v1925 = vpop.f32.mrb[0].mxu0
        %v1926 = vadd.f32 %v1704, %v1925
        %v1927 = vpop.f32.mrb[0].mxu0
        %v1928 = vadd.f32 %v1708, %v1927
        %v1929 = vpop.f32.mrb[0].mxu0
        %v1930 = vadd.f32 %v1704, %v1929
        %v1931 = vpop.f32.mrb[0].mxu0
        %v1932 = vadd.f32 %v1708, %v1931
        %1933 = vmatprep.mubr.bf16.mxu0 %v1658
        %1934 = vmatmul.mubr.bf16.gmra.mrb[0].mxu0 %v1657
        %v1935 = vpop.f32.mrb[0].mxu0
        %v1936 = vadd.f32 %v1704, %v1935
        %v1937 = vpop.f32.mrb[0].mxu0
        %v1938 = vadd.f32 %v1708, %v1937
        %v1939 = vpop.f32.mrb[0].mxu0
        %v1940 = vadd.f32 %v1704, %v1939
        %v1941 = vpop.f32.mrb[0].mxu0
        %v1942 = vadd.f32 %v1708, %v1941
        %1943 = vmatprep.mubr.bf16.mxu0 %v1660
        %1944 = vmatmul.mubr.bf16.gmra.mrb[0].mxu0 %v1659
        %v1945 = vpop.f32.mrb[0].mxu0
        %v1946 = vadd.f32 %v1704, %v1945
        %v1947 = vpop.f32.mrb[0].mxu0
        %v1948 = vadd.f32 %v1708, %v1947
        %v1949 = vpop.f32.mrb[0].mxu0
        %v1950 = vadd.f32 %v1704, %v1949
        %v1951 = vpop.f32.mrb[0].mxu0
        %v1952 = vadd.f32 %v1708, %v1951
        %1953 = vmatprep.mubr.bf16.mxu0 %v1662
        %1954 = vmatmul.mubr.bf16.gmra.mrb[0].mxu0 %v1661
        %v1955 = vpop.f32.mrb[0].mxu0
        %v1956 = vadd.f32 %v1704, %v1955
        %v1957 = vpop.f32.mrb[0].mxu0
        %v1958 = vadd.f32 %v1708, %v1957
        %v1959 = vpop.f32.mrb[0].mxu0
        %v1960 = vadd.f32 %v1704, %v1959
        %v1961 = vpop.f32.mrb[0].mxu0
        %v1962 = vadd.f32 %v1708, %v1961
        %1963 = vmatprep.mubr.bf16.mxu0 %v1664
        %1964 = vmatmul.mubr.bf16.gmra.mrb[0].mxu0 %v1663
        %v1965 = vpop.f32.mrb[0].mxu0
        %v1966 = vadd.f32 %v1704, %v1965
        %v1967 = vpop.f32.mrb[0].mxu0
        %v1968 = vadd.f32 %v1708, %v1967
        %v1969 = vpop.f32.mrb[0].mxu0
        %v1970 = vadd.f32 %v1704, %v1969
        %v1971 = vpop.f32.mrb[0].mxu0
        %v1972 = vadd.f32 %v1708, %v1971
        %1973 = vmatprep.mubr.bf16.mxu0 %v1666
        %1974 = vmatmul.mubr.bf16.gmra.mrb[0].mxu0 %v1665
        %v1975 = vpop.f32.mrb[0].mxu0
        %v1976 = vadd.f32 %v1704, %v1975
        %v1977 = vpop.f32.mrb[0].mxu0
        %v1978 = vadd.f32 %v1708, %v1977
        %v1979 = vpop.f32.mrb[0].mxu0
        %v1980 = vadd.f32 %v1704, %v1979
        %v1981 = vpop.f32.mrb[0].mxu0
        %v1982 = vadd.f32 %v1708, %v1981
        %1983 = vdwg.mxu0
        %v1984 = vmul.f32 %v1906, 0.2
        %v1985 = vmul.f32 %v1908, 0.2
        %v1986 = vmul.f32 %v1910, 0.2
        %v1987 = vmul.f32 %v1912, 0.2
        %v1988 = vmul.f32 %v1916, 0.2
        %v1989 = vmul.f32 %v1918, 0.2
        %v1990 = vmul.f32 %v1920, 0.2
        %v1991 = vmul.f32 %v1922, 0.2
        %v1992 = vmul.f32 %v1926, 0.2
        %v1993 = vmul.f32 %v1928, 0.2
        %v1994 = vmul.f32 %v1930, 0.2
        %v1995 = vmul.f32 %v1932, 0.2
        %v1996 = vmul.f32 %v1936, 0.2
        %v1997 = vmul.f32 %v1938, 0.2
        %v1998 = vmul.f32 %v1940, 0.2
        %v1999 = vmul.f32 %v1942, 0.2
        %v2000 = vmul.f32 %v1946, 0.2
        %v2001 = vmul.f32 %v1948, 0.2
        %v2002 = vmul.f32 %v1950, 0.2
        %v2003 = vmul.f32 %v1952, 0.2
        %v2004 = vmul.f32 %v1956, 0.2
        %v2005 = vmul.f32 %v1958, 0.2
        %v2006 = vmul.f32 %v1960, 0.2
        %v2007 = vmul.f32 %v1962, 0.2
        %v2008 = vmul.f32 %v1966, 0.2
        %v2009 = vmul.f32 %v1968, 0.2
        %v2010 = vmul.f32 %v1970, 0.2
        %v2011 = vmul.f32 %v1972, 0.2
        %v2012 = vmul.f32 %v1976, 0.2
        %v2013 = vmul.f32 %v1978, 0.2
        %v2014 = vmul.f32 %v1980, 0.2
        %v2015 = vmul.f32 %v1982, 0.2
        %v2016 = vmax.f32 %v1906, %v1984
        %v2017 = vmax.f32 %v1908, %v1985
        %v2018 = vmax.f32 %v1910, %v1986
        %v2019 = vmax.f32 %v1912, %v1987
        %v2020 = vmax.f32 %v1916, %v1988
        %v2021 = vmax.f32 %v1918, %v1989
        %v2022 = vmax.f32 %v1920, %v1990
        %v2023 = vmax.f32 %v1922, %v1991
        %v2024 = vmax.f32 %v1926, %v1992
        %v2025 = vmax.f32 %v1928, %v1993
        %v2026 = vmax.f32 %v1930, %v1994
        %v2027 = vmax.f32 %v1932, %v1995
        %v2028 = vmax.f32 %v1936, %v1996
        %v2029 = vmax.f32 %v1938, %v1997
        %v2030 = vmax.f32 %v1940, %v1998
        %v2031 = vmax.f32 %v1942, %v1999
        %v2032 = vmax.f32 %v1946, %v2000
        %v2033 = vmax.f32 %v1948, %v2001
        %v2034 = vmax.f32 %v1950, %v2002
        %v2035 = vmax.f32 %v1952, %v2003
        %v2036 = vmax.f32 %v1956, %v2004
        %v2037 = vmax.f32 %v1958, %v2005
        %v2038 = vmax.f32 %v1960, %v2006
        %v2039 = vmax.f32 %v1962, %v2007
        %v2040 = vmax.f32 %v1966, %v2008
        %v2041 = vmax.f32 %v1968, %v2009
        %v2042 = vmax.f32 %v1970, %v2010
        %v2043 = vmax.f32 %v1972, %v2011
        %v2044 = vmax.f32 %v1976, %v2012
        %v2045 = vmax.f32 %v1978, %v2013
        %v2046 = vmax.f32 %v1980, %v2014
        %v2047 = vmax.f32 %v1982, %v2015
        %v2048 = vld [vmem:[%s5] sm:$0x3]
        %v2049 = vld [vmem:[#allocation2] sm:$0x1]
        %2051 = vset.pattern.permute.xlu0 0
        %2052 = vperm.xlu0 %2051, %v2049
        %v2053 = vpop.permute.xlu0 %2052
        %v2055 = vlaneseq
        %v2056 = vshrl.u32 %v2055, 7
        %v2057 = vsub.s32 0, %v2056
        %v2058 = vrot.slane %v2053, %v2057
        %v2060 = vlaneseq
        %v2061 = vshrl.u32 %v2060, 7
        %v2062 = vsub.s32 0, %v2061
        %v2063 = vrot.slane %v2048, %v2062
        %v2064 = vlaneseq
        %v2065 = vshrl.u32 %v2064, 7
        %v2066 = vsub.s32 1, %v2065
        %v2067 = vrot.slane %v2048, %v2066
        %2070 = vmatprep.subr.mxu0 %v2017
        %2071 = vmatpush1.xpose.msra.mxu0 %v2016
        %2072 = vmatprep.subr.mxu0 %v2019
        %2073 = vmatpush1.xpose.msra.mxu0 %v2018
        %2074 = vmatprep.subr.mxu0 %v2021
        %2075 = vmatpush1.xpose.msra.mxu0 %v2020
        %2076 = vmatprep.subr.mxu0 %v2023
        %2077 = vmatpush1.xpose.msra.mxu0 %v2022
        %2078 = vmatprep.subr.mxu0 %v2025
        %2079 = vmatpush1.xpose.msra.mxu0 %v2024
        %2080 = vmatprep.subr.mxu0 %v2027
        %2081 = vmatpush1.xpose.msra.mxu0 %v2026
        %2082 = vmatprep.subr.mxu0 %v2029
        %2083 = vmatpush1.xpose.msra.mxu0 %v2028
        %2084 = vmatprep.subr.mxu0 %v2031
        %2085 = vmatpush1.xpose.msra.mxu0 %v2030
        %2086 = vmatprep.subr.mxu0 %v2033
        %2087 = vmatpush1.xpose.msra.mxu0 %v2032
        %2088 = vmatprep.subr.mxu0 %v2035
        %2089 = vmatpush1.xpose.msra.mxu0 %v2034
        %2090 = vmatprep.subr.mxu0 %v2037
        %2091 = vmatpush1.xpose.msra.mxu0 %v2036
        %2092 = vmatprep.subr.mxu0 %v2039
        %2093 = vmatpush1.xpose.msra.mxu0 %v2038
        %2094 = vmatprep.subr.mxu0 %v2041
        %2095 = vmatpush1.xpose.msra.mxu0 %v2040
        %2096 = vmatprep.subr.mxu0 %v2043
        %2097 = vmatpush1.xpose.msra.mxu0 %v2042
        %2098 = vmatprep.subr.mxu0 %v2045
        %2099 = vmatpush1.xpose.msra.mxu0 %v2044
        %2100 = vmatprep.subr.mxu0 %v2047
        %2101 = vmatpush1.xpose.msra.mxu0 %v2046
        %2102 = vmatprep.subr.mxu0 0.0
        %2103 = vmatpush1.xpose.msra.mxu0 0.0
        %2104 = vmatprep.subr.mxu0 0.0
        %2105 = vmatpush1.xpose.msra.mxu0 0.0
        %2106 = vmatprep.subr.mxu0 0.0
        %2107 = vmatpush1.xpose.msra.mxu0 0.0
        %2108 = vmatprep.subr.mxu0 0.0
        %2109 = vmatpush1.xpose.msra.mxu0 0.0
        %2110 = vmatprep.subr.mxu0 0.0
        %2111 = vmatpush1.xpose.msra.mxu0 0.0
        %2112 = vmatprep.subr.mxu0 0.0
        %2113 = vmatpush1.xpose.msra.mxu0 0.0
        %2114 = vmatprep.subr.mxu0 0.0
        %2115 = vmatpush1.xpose.msra.mxu0 0.0
        %2116 = vmatprep.subr.mxu0 0.0
        %2117 = vmatpush1.xpose.msra.mxu0 0.0
        %2118 = vmatprep.subr.mxu0 0.0
        %2119 = vmatpush1.xpose.msra.mxu0 0.0
        %2120 = vmatprep.subr.mxu0 0.0
        %2121 = vmatpush1.xpose.msra.mxu0 0.0
        %2122 = vmatprep.subr.mxu0 0.0
        %2123 = vmatpush1.xpose.msra.mxu0 0.0
        %2124 = vmatprep.subr.mxu0 0.0
        %2125 = vmatpush1.xpose.msra.mxu0 0.0
        %2126 = vmatprep.subr.mxu0 0.0
        %2127 = vmatpush1.xpose.msra.mxu0 0.0
        %2128 = vmatprep.subr.mxu0 0.0
        %2129 = vmatpush1.xpose.msra.mxu0 0.0
        %2130 = vmatprep.subr.mxu0 0.0
        %2131 = vmatpush1.xpose.msra.mxu0 0.0
        %2132 = vmatprep.subr.mxu0 0.0
        %2133 = vmatpush1.xpose.msra.mxu0 0.0
        %2134 = vmatprep.mubr.f32.mxu0 %v2067
        %2135 = vmatmul.mubr.f32.gmra.mrb[0].mxu0 %v2063
        %v2136 = vpop.f32.mrb[0].mxu0
        %v2137 = vadd.f32 %v2058, %v2136
        %v2138 = vpop.f32.mrb[0].mxu0
        %2139 = vdwg.mxu0
        %v2140 = vxor.u32 %v2137, 2147483648
        %v2141 = vmul.f32 %v2140, 1.442695
        %v2142 = vpow.pop %v2141
        %v2143 = vadd.f32 %v2142, 1.0
        %v2144 = vrcp.pop %v2143
        %v2145 = vmul.f32 1.0, %v2144
        %2146 = vst [vmem:[%s334] sm:$0x1] %v2145
        %s2147 = sand.u32 %s187, 1
        %s2148 = scalar_lea.sflag [#allocation5], %s2147
        %s2149 = sand.u32 %s187, 1
        %s2150 = scalar_lea.vmem [#allocation9], %s2149
        // Predicated region
        $region61: #{tpu_custom_call.1} parent=47 // pred_check
          %p2151 = pneg %p197
        $region62: #{tpu_custom_call.1} parent=47 // pred_check_branch
          %2153 = sbr.rel (%p2151) target = $region64
        $region63: #{tpu_custom_call.1} parent=47 // pred_region
          %s2155 = ssub.s32 16, 16
          %2156 = vsyncadd %s2148, %s2155
          %s2157 = smul.addr %s27, 16
          %s2158 = scalar_lea.hbm %s7, %s2157
          %s2160 = sshll.u32 %s2150, 4
          %s2161 = int_to_ptr.vmem [resolvable:$true] %s2160
          %2163 = dma.vmem_to_hbm [thread:$0]  %s2161, 16, %s2158, %s2148
        $region64: #{tpu_custom_call.1} parent=47 // pred_fallthru
          _
      $region48: #{tpu_custom_call.1} parent=5 // pred_fallthru
        _
      %p2164 = scmp.le.s32.totalorder 2, %s22
      // Predicated region
      $region65: #{tpu_custom_call.1} parent=5 // pred_check
        %p2165 = pneg %p2164
      $region66: #{tpu_custom_call.1} parent=5 // pred_check_branch
        %2167 = sbr.rel (%p2165) target = $region68
      $region67: #{tpu_custom_call.1} parent=5 // pred_region
        %s2168 = ssub.s32 %s22, 2
        // Predicated region
        $region69: #{tpu_custom_call.1} parent=67 // pred_check
          %p2169 = pneg %p203
        $region70: #{tpu_custom_call.1} parent=67 // pred_check_branch
          %2171 = sbr.rel (%p2169) target = $region72
        $region71: #{tpu_custom_call.1} parent=67 // pred_region
          %s2172 = sand.u32 %s188, 1
          %s2173 = scalar_lea.sflag [#allocation5], %s2172
          %s2174 = sand.u32 %s188, 1
          %s2175 = scalar_lea.vmem [#allocation9], %s2174
          %2176 = dma.done %s2173, 16
        $region72: #{tpu_custom_call.1} parent=67 // pred_fallthru
          _
      $region68: #{tpu_custom_call.1} parent=5 // pred_fallthru
        _
    $region6: #{tpu_custom_call.1} parent=1 // loop_footer
      %s26 = sadd.s32 1, %s22
    $region7: #{tpu_custom_call.1} parent=1 // loop_footer_branch
      %21 = sbr.rel target = $region3
    $region8: #{tpu_custom_call.1} parent=1 // loop_exit
      _
    %2177 = vsyncpa [#allocation4], 1
    %s2178 = scalar_lea.sflag [#allocation4], 1
    %2179 = vsyncpa %s2178, 1
    %2180 = vsyncpa [#allocation7], 1
    %2181 = vsyncpa [#allocation5], 1
    %s2182 = scalar_lea.sflag [#allocation5], 1
    %2183 = vsyncpa %s2182, 1

</llo_original>
